<compile_context>
chip_gen: v7x
topology: tpu7x:2x2x1
jax: 0.10.0
libtpu: 0.0.40
codegen_flags: <defaults>
</compile_context>

<pallas_src>
import math
import functools

import jax
import jax.numpy as jnp
from jax import lax
from jax.experimental import pallas as pl
from jax.experimental.pallas import tpu as pltpu

EPS = 1e-6


def _layernorm_f32(x, a, b):
    """Module's LayerNorm: unbiased std (ddof=1), eps added to the std, exact div."""
    d = x.shape[-1]
    mean = jnp.mean(x, axis=-1, keepdims=True)
    c = x - mean
    var = jnp.sum(c * c, axis=-1, keepdims=True) * (1.0 / (d - 1))
    return a * c / (jnp.sqrt(var) + EPS) + b


# ------------------------ kernel A: LN1 + fused KV projection ------------------------
def ln1_kv_kernel(x_ref, ln1_a_ref, ln1_b_ref, wkv_ref, bkv_ref, k_ref, v_ref):
    x = x_ref[0]                                     # (TQ, D) f32
    d = x.shape[-1]
    ln1 = _layernorm_f32(x, ln1_a_ref[0], ln1_b_ref[0])
    kv = jnp.dot(ln1.astype(wkv_ref.dtype), wkv_ref[...],
                 preferred_element_type=jnp.float32) + bkv_ref[0]   # (TQ, 2D)
    k_ref[0] = kv[:, :d].astype(k_ref.dtype)         # lane-aligned split (D % 128 == 0)
    v_ref[0] = kv[:, d:].astype(v_ref.dtype)


# ----- kernel B: Q proj + attention + Wo + LN2 + FFN + both residuals (query-tiled) -----
def attn_ffn_kernel(x_ref, k_ref, v_ref, neg_ref,
                    ln1_a_ref, ln1_b_ref, wq_ref, bq_ref,
                    wo_ref, bo_ref, ln2_a_ref, ln2_b_ref,
                    w1_ref, b1_ref, w2_ref, b2_ref,
                    o_ref, *, num_heads):
    x = x_ref[0]                                     # (TQ, D) f32; dropped after LN1
    d = x.shape[-1]
    dk = d // num_heads
    neg = neg_ref[0]                                 # (1, S) additive mask bias (0 / -1e9)

    # LN1 + Q projection recomputed for this query tile (kernel A no longer
    # writes Q to HBM).  1/sqrt(d_k) already folded into Wq / bq on the host.
    ln1 = _layernorm_f32(x, ln1_a_ref[0], ln1_b_ref[0])
    q = (jnp.dot(ln1.astype(wq_ref.dtype), wq_ref[...],
                 preferred_element_type=jnp.float32) + bq_ref[0]
         ).astype(wq_ref.dtype)                      # (TQ, D) bf16

    k = k_ref[0]                                     # (S, D) bf16
    v = v_ref[0]                                     # (S, D) bf16

    # Per-head attention.  NOTE: dk < 128 under-fills the MXU contraction for
    # the QK^T / PV dots; real deployments should use dk >= 128 (or a
    # head-batched dot_general layout).  Rows whose keys are all masked get a
    # uniform distribution over the masked keys (matches masked_fill semantics).
    head_out = []
    for h in range(num_heads):                       # static unroll over heads
        lo, hi = h * dk, (h + 1) * dk
        qh, kh, vh = q[:, lo:hi], k[:, lo:hi], v[:, lo:hi]
        s = lax.dot_general(qh, kh, (((1,), (1,)), ((), ())),
                            preferred_element_type=jnp.float32) + neg   # (TQ, S)
        m = jnp.max(s, axis=-1, keepdims=True)
        p = jnp.exp(s - m)                           # un-normalized probabilities
        # Deferred softmax normalization: scale the (TQ, dk) head output instead
        # of the (TQ, S) probability tile.
        inv = pl.reciprocal(jnp.sum(p, axis=-1, keepdims=True), approx=True)
        oh = jnp.dot(p.astype(vh.dtype), vh, preferred_element_type=jnp.float32)
        head_out.append((oh * inv).astype(wo_ref.dtype))

    # ONE full-contraction output projection: (TQ, D) x (D, D).  (Head outputs
    # concatenated on the lane axis; equivalently they could be written into a
    # (TQ, D) VMEM scratch at lane offset h*dk.)
    attn = jnp.dot(jnp.concatenate(head_out, axis=-1), wo_ref[...],
                   preferred_element_type=jnp.float32)

    x1 = x_ref[0] + attn + bo_ref[0]                 # residual 1 (x re-loaded; dropout = identity)

    ln2 = _layernorm_f32(x1, ln2_a_ref[0], ln2_b_ref[0])
    hid = jnp.dot(ln2.astype(w1_ref.dtype), w1_ref[...],
                  preferred_element_type=jnp.float32) + b1_ref[0]
    hid = jnp.maximum(hid, 0.0)
    ff = jnp.dot(hid.astype(w2_ref.dtype), w2_ref[...],
                 preferred_element_type=jnp.float32) + b2_ref[0]
    o_ref[0] = (x1 + ff).astype(o_ref.dtype)         # residual 2


# ------------------------------------ wrapper ------------------------------------
def _prepare_params(p, num_heads, mxu_dtype):
    f32 = jnp.float32
    d = p["wq"].shape[0]
    dk = d // num_heads
    scale = jnp.asarray(1.0 / math.sqrt(dk), f32)
    return dict(
        ln1_a=p["ln1_a"].astype(f32), ln1_b=p["ln1_b"].astype(f32),
        wq=(p["wq"].astype(f32) * scale).astype(mxu_dtype),   # fold 1/sqrt(d_k)
        bq=p["bq"].astype(f32) * scale,
        wkv=jnp.concatenate([p["wk"].astype(f32), p["wv"].astype(f32)],
                            axis=1).astype(mxu_dtype),
        bkv=jnp.concatenate([p["bk"].astype(f32), p["bv"].astype(f32)], axis=1),
        wo=p["wo"].astype(mxu_dtype), bo=p["bo"].astype(f32),
        ln2_a=p["ln2_a"].astype(f32), ln2_b=p["ln2_b"].astype(f32),
        w1=p["w1"].astype(mxu_dtype), b1=p["b1"].astype(f32),
        w2=p["w2"].astype(mxu_dtype), b2=p["b2"].astype(f32),
    )


def _vmem_capacity_bytes():
    try:
        return int(pltpu.get_tpu_info().vmem_capacity_bytes)
    except Exception:
        return 64 * 2**20        # conservative fallback (v7x-sized)


def _vmem_limit(working_set_bytes, capacity):
    # Generation-aware scoped-VMEM cap: ~102 MiB on 128-MiB chips (v5e/v6e),
    # ~51 MiB on v7x.  Never below the 32 MiB default-ish floor.
    hard_cap = max(48 * 2**20, int(0.80 * capacity))
    return int(min(hard_cap, max(32 * 2**20, int(1.5 * working_set_bytes))))


@functools.lru_cache(maxsize=None)
def _buffered_supported():
    """Compile-only probe for pipeline_mode=pl.Buffered(1).

    Covers both usages (constant-index weight blocks and batch-indexed K/V
    blocks) on a tiny kernel, so the real layer never has to be executed twice
    and genuine runtime errors in the real kernels are never swallowed.
    """
    if not hasattr(pl, "Buffered"):
        return False
    try:
        def probe_kernel(w_ref, x_ref, o_ref):
            o_ref[...] = x_ref[...] + w_ref[...]

        fn = pl.pallas_call(
            probe_kernel,
            out_shape=jax.ShapeDtypeStruct((16, 128), jnp.float32),
            grid_spec=pltpu.PrefetchScalarGridSpec(
                num_scalar_prefetch=0, grid=(2,),
                in_specs=[
                    pl.BlockSpec((8, 128), lambda i: (0, 0),
                                 pipeline_mode=pl.Buffered(1)),   # constant-index
                    pl.BlockSpec((8, 128), lambda i: (i, 0),
                                 pipeline_mode=pl.Buffered(1)),   # changing-index
                ],
                out_specs=pl.BlockSpec((8, 128), lambda i: (i, 0))),
        )
        jax.jit(fn).lower(jnp.zeros((8, 128), jnp.float32),
                          jnp.zeros((16, 128), jnp.float32)).compile()
        return True
    except Exception:
        return False


def _pick_tile(target, s):
    t = max(8, min(target, s))
    while s % t:
        t //= 2
    return max(t, 1)


def _run(x, neg, prm, num_heads, tq_a, tq_b, *, weight_mode, kv_mode, vmem_cap):
    B, S, D = x.shape
    dff = prm["w1"].shape[1]
    f32 = jnp.float32
    mxu_dtype = prm["wkv"].dtype
    wsz = jnp.dtype(mxu_dtype).itemsize
    wbuf = 1 if weight_mode is not None else 2
    kvbuf = 1 if kv_mode is not None else 2

    def const_spec(shape, mode=None):
        index_map = lambda b, i: (0,) * len(shape)
        if mode is not None:
            return pl.BlockSpec(shape, index_map, pipeline_mode=mode)
        return pl.BlockSpec(shape, index_map)

    def seq_spec(blk):
        return pl.BlockSpec(blk, lambda b, i: (b, i, 0))

    def batch_spec(blk, mode=None):
        index_map = lambda b, i: (b, 0, 0)
        if mode is not None:
            return pl.BlockSpec(blk, index_map, pipeline_mode=mode)
        return pl.BlockSpec(blk, index_map)

    # ------------------- kernel A: LN1 + fused KV projection -------------------
    work_a = (wbuf * (prm["wkv"].nbytes + prm["bkv"].nbytes)
              + 2 * tq_a * D * 4                 # x tile (double-buffered)
              + 2 * 2 * tq_a * D * wsz           # k/v output tiles
              + tq_a * 2 * D * 4)                # kv intermediate
    k, v = pl.pallas_call(
        ln1_kv_kernel,
        out_shape=[jax.ShapeDtypeStruct((B, S, D), mxu_dtype) for _ in range(2)],
        grid_spec=pltpu.PrefetchScalarGridSpec(
            num_scalar_prefetch=0,
            grid=(B, S // tq_a),
            in_specs=[
                seq_spec((1, tq_a, D)),                          # x
                const_spec((1, D)), const_spec((1, D)),          # ln1 a, b
                const_spec((D, 2 * D), weight_mode),             # fused Wkv
                const_spec((1, 2 * D)),                          # fused bias
            ],
            out_specs=[seq_spec((1, tq_a, D)) for _ in range(2)],
        ),
        compiler_params=pltpu.CompilerParams(
            dimension_semantics=("parallel", "parallel"),
            vmem_limit_bytes=_vmem_limit(work_a, vmem_cap)),
    )(x, prm["ln1_a"], prm["ln1_b"], prm["wkv"], prm["bkv"])

    # ---- kernel B: Q proj + attention + Wo + LN2 + FFN + residuals ----
    work_b = (wbuf * (prm["wq"].nbytes + prm["wo"].nbytes
                      + prm["w1"].nbytes + prm["w2"].nbytes)
              + kvbuf * 2 * S * D * wsz          # full-length K and V
              + 2 * 2 * tq_b * D * 4             # x tile + out tile
              + tq_b * D * (4 + wsz)             # q / concatenated head output
              + tq_b * S * 4                     # per-head score tile
              + tq_b * dff * 4)                  # FFN hidden
    kernel_b = functools.partial(attn_ffn_kernel, num_heads=num_heads)
    out = pl.pallas_call(
        kernel_b,
        out_shape=jax.ShapeDtypeStruct((B, S, D), f32),
        grid_spec=pltpu.PrefetchScalarGridSpec(
            num_scalar_prefetch=0,
            grid=(B, S // tq_b),
            in_specs=[
                seq_spec((1, tq_b, D)),               # x (residual stream, f32)
                batch_spec((1, S, D), kv_mode),       # K, full length
                batch_spec((1, S, D), kv_mode),       # V, full length
                batch_spec((1, 1, S)),                # additive mask bias
                const_spec((1, D)), const_spec((1, D)),               # ln1 a, b
                const_spec((D, D), weight_mode), const_spec((1, D)),  # Wq, bq (scaled)
                const_spec((D, D), weight_mode), const_spec((1, D)),  # Wo, bo
                const_spec((1, D)), const_spec((1, D)),               # ln2 a, b
                const_spec((D, dff), weight_mode), const_spec((1, dff)),   # W1, b1
                const_spec((dff, D), weight_mode), const_spec((1, D)),     # W2, b2
            ],
            out_specs=seq_spec((1, tq_b, D)),
        ),
        compiler_params=pltpu.CompilerParams(
            dimension_semantics=("parallel", "parallel"),
            vmem_limit_bytes=_vmem_limit(work_b, vmem_cap)),
    )(x, k, v, neg,
      prm["ln1_a"], prm["ln1_b"], prm["wq"], prm["bq"],
      prm["wo"], prm["bo"], prm["ln2_a"], prm["ln2_b"],
      prm["w1"], prm["b1"], prm["w2"], prm["b2"])
    return out


def encoder_layer(x, mask, params, num_heads, *, tq=None, mxu_dtype=jnp.bfloat16):
    B, S, D = x.shape
    assert D % num_heads == 0
    dff = params["w1"].shape[1]

    vmem_cap = _vmem_capacity_bytes()
    big_vmem = vmem_cap >= 96 * 2**20     # v5e/v6e (128 MiB) vs v7x (64 MiB)

    if tq is None:
        tq_a = 512 if big_vmem else 256   # kernel A: mem-bound LN+GEMM -> big tiles
        tq_b = 256 if big_vmem else 128
        # keep kernel B's (tq*S) score tile + (tq*dff) hidden within ~12 MiB
        while tq_b > 128 and 4 * tq_b * (S + dff) > 12 * 2**20:
            tq_b //= 2
    else:
        tq_a = tq_b = tq
    tq_a = _pick_tile(tq_a, S)
    tq_b = _pick_tile(tq_b, S)
    for tt in (tq_a, tq_b):
        assert tt == S or tt % 8 == 0, (
            f"query tile {tt} must divide S and be a multiple of 8")

    x = x.astype(jnp.float32)
    # Additive mask bias precomputed on the host (no per-step VPU select in-kernel).
    neg = jnp.where(mask.astype(jnp.float32) == 0.0,
                    jnp.float32(-1e9), jnp.float32(0.0))
    prm = _prepare_params(params, num_heads, mxu_dtype)

    buffered_ok = _buffered_supported()
    # Constant-index weight blocks: single-buffering is a pure VMEM win.
    weight_mode = pl.Buffered(1) if buffered_ok else None
    # Full-length K/V only change on the outer batch axis: single-buffer them
    # on small-VMEM (v7x-class) chips to halve their residency.
    kv_mode = pl.Buffered(1) if (buffered_ok and not big_vmem) else None

    return _run(x, neg, prm, num_heads, tq_a, tq_b,
                weight_mode=weight_mode, kv_mode=kv_mode, vmem_cap=vmem_cap)


# ------------------------- pure-JAX reference -------------------------
def encoder_layer_ref(x, mask, p, num_heads):
    B, S, D = x.shape
    dk = D // num_heads

    def ln(v, a, b):
        mean = jnp.mean(v, axis=-1, keepdims=True)
        var = jnp.sum((v - mean) ** 2, axis=-1, keepdims=True) / (D - 1)
        return a[0] * (v - mean) / (jnp.sqrt(var) + EPS) + b[0]

    n1 = ln(x, p["ln1_a"], p["ln1_b"])
    q = n1 @ p["wq"] + p["bq"][0]
    k = n1 @ p["wk"] + p["bk"][0]
    v = n1 @ p["wv"] + p["bv"][0]
    qh = q.reshape(B, S, num_heads, dk).transpose(0, 2, 1, 3)
    kh = k.reshape(B, S, num_heads, dk).transpose(0, 2, 1, 3)
    vh = v.reshape(B, S, num_heads, dk).transpose(0, 2, 1, 3)
    scores = jnp.einsum("bhqd,bhkd->bhqk", qh, kh) / math.sqrt(dk)
    scores = jnp.where(mask[:, None, :, :] == 0.0, -1e9, scores)
    attn = jax.nn.softmax(scores, axis=-1)
    out = jnp.einsum("bhqk,bhkd->bhqd", attn, vh).transpose(0, 2, 1, 3).reshape(B, S, D)
    x1 = x + (out @ p["wo"] + p["bo"][0])
    n2 = ln(x1, p["ln2_a"], p["ln2_b"])
    ff = jnp.maximum(n2 @ p["w1"] + p["b1"][0], 0.0) @ p["w2"] + p["b2"][0]
    return x1 + ff


if __name__ == "__main__":
    # Lane-aligned small shapes (S, D, d_ff multiples of 128).
    B, S, D, H, DFF = 2, 256, 128, 4, 512

    key = jax.random.PRNGKey(0)
    keys = jax.random.split(key, 17)

    def init(k, shape, scale=0.05):
        return (scale * jax.random.normal(k, shape)).astype(jnp.float32)

    params = {
        "ln1_a": (1.0 + 0.1 * jax.random.normal(keys[12], (1, D))).astype(jnp.float32),
        "ln1_b": init(keys[13], (1, D)),
        "wq": init(keys[0], (D, D)), "bq": init(keys[1], (1, D)),
        "wk": init(keys[2], (D, D)), "bk": init(keys[3], (1, D)),
        "wv": init(keys[4], (D, D)), "bv": init(keys[5], (1, D)),
        "wo": init(keys[6], (D, D)), "bo": init(keys[7], (1, D)),
        "ln2_a": (1.0 + 0.1 * jax.random.normal(keys[14], (1, D))).astype(jnp.float32),
        "ln2_b": init(keys[15], (1, D)),
        "w1": init(keys[8], (D, DFF)), "b1": init(keys[9], (1, DFF)),
        "w2": init(keys[10], (DFF, D)), "b2": init(keys[11], (1, D)),
    }

    x = jax.random.normal(keys[16], (B, S, D), jnp.float32)
    # mask: batch 0 attends everywhere; batch 1 masks out the last 64 key positions
    mask = jnp.ones((B, 1, S), jnp.float32)
    mask = mask.at[1, 0, S - 64:].set(0.0)

    out = encoder_layer(x, mask, params, num_heads=H)
    out = jax.block_until_ready(out)

    ref = encoder_layer_ref(x, mask, params, num_heads=H)
    max_err = jnp.max(jnp.abs(out - ref))
    # Tolerance accounts for bf16 MXU operands + the approx EUP reciprocal in
    # softmax (LayerNorm stats, residuals and accumulation are exact f32).
    assert jnp.allclose(out, ref, rtol=2e-2, atol=2e-2), (
        f"mismatch vs reference (max abs err = {max_err})")
    print("KERNEL_OK")
</pallas_src>

<mosaic_0001>
module attributes {stable_mosaic.version = 11 : i64} {
  func.func @ln1_kv_kernel(%arg0: i32, %arg1: i32, %arg2: memref<1x256x128xf32, #tpu.memory_space<vmem>>, %arg3: memref<1x128xf32, #tpu.memory_space<vmem>>, %arg4: memref<1x128xf32, #tpu.memory_space<vmem>>, %arg5: memref<128x256xbf16, #tpu.memory_space<vmem>>, %arg6: memref<1x256xf32, #tpu.memory_space<vmem>>, %arg7: memref<1x256x128xbf16, #tpu.memory_space<vmem>>, %arg8: memref<1x256x128xbf16, #tpu.memory_space<vmem>>) attributes {dimension_semantics = [#tpu.dimension_semantics<parallel>, #tpu.dimension_semantics<parallel>], iteration_bounds = array<i64: 2, 1>, scalar_prefetch = 0 : i64, scratch_operands = 0 : i64, tpu.core_type = #tpu.core_type<tc>, window_params = [{transform_indices = @transform_0, window_bounds = array<i64: 1, 256, 128>}, {pipeline_mode = #tpu.pipeline_mode<synchronous>, transform_indices = @transform_1, window_bounds = array<i64: 1, 128>}, {pipeline_mode = #tpu.pipeline_mode<synchronous>, transform_indices = @transform_2, window_bounds = array<i64: 1, 128>}, {pipeline_mode = #tpu.pipeline_mode<synchronous>, transform_indices = @transform_3, window_bounds = array<i64: 128, 256>}, {pipeline_mode = #tpu.pipeline_mode<synchronous>, transform_indices = @transform_4, window_bounds = array<i64: 1, 256>}, {transform_indices = @transform_5, window_bounds = array<i64: 1, 256, 128>}, {transform_indices = @transform_6, window_bounds = array<i64: 1, 256, 128>}]} {
    %c0 = arith.constant 0 : index
    %c0_0 = arith.constant 0 : index
    %c0_1 = arith.constant 0 : index
    %0 = vector.load %arg2[%c0, %c0_0, %c0_1] : memref<1x256x128xf32, #tpu.memory_space<vmem>>, vector<1x256x128xf32>
    %1 = vector.shape_cast %0 : vector<1x256x128xf32> to vector<256x128xf32>
    %c0_2 = arith.constant 0 : index
    %c0_3 = arith.constant 0 : index
    %2 = vector.load %arg3[%c0_2, %c0_3] : memref<1x128xf32, #tpu.memory_space<vmem>>, vector<1x128xf32>
    %3 = vector.shape_cast %2 : vector<1x128xf32> to vector<128xf32>
    %c0_4 = arith.constant 0 : index
    %c0_5 = arith.constant 0 : index
    %4 = vector.load %arg4[%c0_4, %c0_5] : memref<1x128xf32, #tpu.memory_space<vmem>>, vector<1x128xf32>
    %5 = vector.shape_cast %4 : vector<1x128xf32> to vector<128xf32>
    %cst = arith.constant dense<0.000000e+00> : vector<256xf32>
    %6 = vector.multi_reduction <add>, %1, %cst [1] : vector<256x128xf32> to vector<256xf32>
    %7 = vector.shape_cast %6 : vector<256xf32> to vector<256x1xf32>
    %cst_6 = arith.constant 1.280000e+02 : f32
    %8 = vector.broadcast %cst_6 : f32 to vector<256x1xf32>
    %9 = arith.divf %7, %8 : vector<256x1xf32>
    %10 = vector.broadcast %9 : vector<256x1xf32> to vector<256x128xf32>
    %11 = arith.subf %1, %10 : vector<256x128xf32>
    %12 = arith.mulf %11, %11 : vector<256x128xf32>
    %cst_7 = arith.constant dense<0.000000e+00> : vector<256xf32>
    %13 = vector.multi_reduction <add>, %12, %cst_7 [1] : vector<256x128xf32> to vector<256xf32>
    %14 = vector.shape_cast %13 : vector<256xf32> to vector<256x1xf32>
    %cst_8 = arith.constant 0.00787401571 : f32
    %15 = vector.broadcast %cst_8 : f32 to vector<256x1xf32>
    %16 = arith.mulf %14, %15 : vector<256x1xf32>
    %17 = vector.shape_cast %3 : vector<128xf32> to vector<1x128xf32>
    %18 = vector.broadcast %17 : vector<1x128xf32> to vector<256x128xf32>
    %19 = arith.mulf %18, %11 : vector<256x128xf32>
    %20 = math.sqrt %16 : vector<256x1xf32>
    %cst_9 = arith.constant 9.99999997E-7 : f32
    %21 = vector.broadcast %cst_9 : f32 to vector<256x1xf32>
    %22 = arith.addf %20, %21 : vector<256x1xf32>
    %23 = vector.broadcast %22 : vector<256x1xf32> to vector<256x128xf32>
    %24 = arith.divf %19, %23 : vector<256x128xf32>
    %25 = vector.shape_cast %5 : vector<128xf32> to vector<1x128xf32>
    %26 = vector.broadcast %25 : vector<1x128xf32> to vector<256x128xf32>
    %27 = arith.addf %24, %26 : vector<256x128xf32>
    %28 = arith.truncf %27 : vector<256x128xf32> to vector<256x128xbf16>
    %c0_10 = arith.constant 0 : index
    %c0_11 = arith.constant 0 : index
    %29 = vector.load %arg5[%c0_10, %c0_11] : memref<128x256xbf16, #tpu.memory_space<vmem>>, vector<128x256xbf16>
    %cst_12 = arith.constant dense<0.000000e+00> : vector<256x256xf32>
    %30 = tpu.matmul %28, %29, %cst_12 {dimension_numbers = #tpu.dot_dimension_numbers<[1], [0], [0], [1], [0, 0, 1, 1], [], []>} : vector<256x128xbf16>, vector<128x256xbf16>, vector<256x256xf32> -> vector<256x256xf32>
    %c0_13 = arith.constant 0 : index
    %c0_14 = arith.constant 0 : index
    %31 = vector.load %arg6[%c0_13, %c0_14] : memref<1x256xf32, #tpu.memory_space<vmem>>, vector<1x256xf32>
    %32 = vector.shape_cast %31 : vector<1x256xf32> to vector<256xf32>
    %33 = vector.shape_cast %32 : vector<256xf32> to vector<1x256xf32>
    %34 = vector.broadcast %33 : vector<1x256xf32> to vector<256x256xf32>
    %35 = arith.addf %30, %34 : vector<256x256xf32>
    %36 = vector.extract_strided_slice %35 {offsets = [0, 0], sizes = [256, 128], strides = [1, 1]} : vector<256x256xf32> to vector<256x128xf32>
    %37 = arith.truncf %36 : vector<256x128xf32> to vector<256x128xbf16>
    %c0_15 = arith.constant 0 : index
    %c0_16 = arith.constant 0 : index
    %c0_17 = arith.constant 0 : index
    %38 = vector.load %arg7[%c0_15, %c0_16, %c0_17] : memref<1x256x128xbf16, #tpu.memory_space<vmem>>, vector<1x256x128xbf16>
    %39 = vector.shape_cast %38 : vector<1x256x128xbf16> to vector<256x128xbf16>
    %40 = vector.shape_cast %37 : vector<256x128xbf16> to vector<1x256x128xbf16>
    tpu.vector_store %arg7[%c0_15, %c0_16, %c0_17], %40 {strides = array<i32>} : memref<1x256x128xbf16, #tpu.memory_space<vmem>>, vector<1x256x128xbf16>,
    %41 = vector.extract_strided_slice %35 {offsets = [0, 128], sizes = [256, 128], strides = [1, 1]} : vector<256x256xf32> to vector<256x128xf32>
    %42 = arith.truncf %41 : vector<256x128xf32> to vector<256x128xbf16>
    %c0_18 = arith.constant 0 : index
    %c0_19 = arith.constant 0 : index
    %c0_20 = arith.constant 0 : index
    %43 = vector.load %arg8[%c0_18, %c0_19, %c0_20] : memref<1x256x128xbf16, #tpu.memory_space<vmem>>, vector<1x256x128xbf16>
    %44 = vector.shape_cast %43 : vector<1x256x128xbf16> to vector<256x128xbf16>
    %45 = vector.shape_cast %42 : vector<256x128xbf16> to vector<1x256x128xbf16>
    tpu.vector_store %arg8[%c0_18, %c0_19, %c0_20], %45 {strides = array<i32>} : memref<1x256x128xbf16, #tpu.memory_space<vmem>>, vector<1x256x128xbf16>,
    return
  }
  func.func @transform_0(%arg0: i32, %arg1: i32) -> (i32, i32, i32) {
    %c0_i32 = arith.constant 0 : i32
    %c0_i32_0 = arith.constant 0 : i32
    return %arg0, %arg1, %c0_i32 : i32, i32, i32
  }
  func.func @transform_1(%arg0: i32, %arg1: i32) -> (i32, i32) {
    %c0_i32 = arith.constant 0 : i32
    %c0_i32_0 = arith.constant 0 : i32
    %c0_i32_1 = arith.constant 0 : i32
    return %c0_i32, %c0_i32_0 : i32, i32
  }
  func.func @transform_2(%arg0: i32, %arg1: i32) -> (i32, i32) {
    %c0_i32 = arith.constant 0 : i32
    %c0_i32_0 = arith.constant 0 : i32
    %c0_i32_1 = arith.constant 0 : i32
    return %c0_i32, %c0_i32_0 : i32, i32
  }
  func.func @transform_3(%arg0: i32, %arg1: i32) -> (i32, i32) {
    %c0_i32 = arith.constant 0 : i32
    %c0_i32_0 = arith.constant 0 : i32
    %c0_i32_1 = arith.constant 0 : i32
    return %c0_i32, %c0_i32_0 : i32, i32
  }
  func.func @transform_4(%arg0: i32, %arg1: i32) -> (i32, i32) {
    %c0_i32 = arith.constant 0 : i32
    %c0_i32_0 = arith.constant 0 : i32
    %c0_i32_1 = arith.constant 0 : i32
    return %c0_i32, %c0_i32_0 : i32, i32
  }
  func.func @transform_5(%arg0: i32, %arg1: i32) -> (i32, i32, i32) {
    %c0_i32 = arith.constant 0 : i32
    %c0_i32_0 = arith.constant 0 : i32
    return %arg0, %arg1, %c0_i32 : i32, i32, i32
  }
  func.func @transform_6(%arg0: i32, %arg1: i32) -> (i32, i32, i32) {
    %c0_i32 = arith.constant 0 : i32
    %c0_i32_0 = arith.constant 0 : i32
    return %arg0, %arg1, %c0_i32 : i32, i32, i32
  }
}

</mosaic_0001>

<llo_original>
// kernel: tpu_custom_call.1
$region0: #{tpu_custom_call.1}
  #allocation0 [shape = 'u32[]', space=smem, size = 0x4, offset = 0x4, fixed_abs, tag = 'smem constant byte address 0x4 - core index']
  #allocation1 [shape = 'u32[144,128]{1,0:T(1,128)}', space=vmem, size = 0x12000, scoped, tag = 'internal scratch']
  %s0 = inlined_call_operand.hbm [shape: f32[2,256,128], index: 0, kind: input, shape index: {}]
  %s1 = inlined_call_operand.vmem [shape: f32[1,128], index: 1, kind: input, shape index: {}]
  %s2 = inlined_call_operand.vmem [shape: f32[1,128], index: 2, kind: input, shape index: {}]
  %s3 = inlined_call_operand.hbm [shape: bf16[128,256], index: 3, kind: input, shape index: {}]
  %s4 = inlined_call_operand.vmem [shape: f32[1,256], index: 4, kind: input, shape index: {}]
  %s5 = inlined_call_operand.hbm [shape: bf16[2,256,128], index: 5, kind: output, shape index: {0}]
  %s6 = inlined_call_operand.hbm [shape: bf16[2,256,128], index: 6, kind: output, shape index: {1}]
  %7 = xla_tuple %s5, %s6
  %s8 = sld [smem:[#allocation0]]
  $region69: #{tpu_custom_call.1} parent=0
    _
  %s10 = ssub.s32 1, %s8
  %s11 = scalar_select 0, %s10, %s8
  $region1: #{tpu_custom_call.1} parent=0
    #allocation2 [shape = 'u8[262144]{0}', space=vmem, size = 0x40000, scoped, tag = 'input window, operand 0']
    #allocation3 [shape = 's32[2]{0}', space=sflag, size = 0x8, scoped, tag = 'scoped memory for tpu_custom_call.1']
    #allocation4 [shape = 's32[2]{0}', space=sflag, size = 0x8, scoped, tag = 'scoped memory for tpu_custom_call.1']
    #allocation5 [shape = 'u8[65536]{0}', space=vmem, size = 0x10000, scoped, tag = 'input window, operand 3, single buffered']
    #allocation6 [shape = 's32[1]{0}', space=sflag, size = 0x4, scoped, tag = 'scoped memory for tpu_custom_call.1']
    #allocation7 [shape = 'u8[131072]{0}', space=vmem, size = 0x20000, scoped, tag = 'output window, operand 0']
    #allocation8 [shape = 'u8[131072]{0}', space=vmem, size = 0x20000, scoped, tag = 'output window, operand 1']
    #allocation9 [shape = 's32[2]{0}', space=sflag, size = 0x8, scoped, tag = 'scoped memory for tpu_custom_call.1']
    %12 = vsyncpa [#allocation3], 0
    %s13 = scalar_lea.sflag [#allocation3], 1
    %14 = vsyncpa %s13, 0
    %15 = vsyncpa [#allocation6], 0
    %16 = vsyncpa [#allocation4], 0
    %s17 = scalar_lea.sflag [#allocation4], 1
    %18 = vsyncpa %s17, 0
    %19 = vsyncpa [#allocation9], 0
    %s20 = scalar_lea.sflag [#allocation9], 1
    %21 = vsyncpa %s20, 0
    loop: start=0, step=1, limit=4
    $region2: #{tpu_custom_call.1} parent=1 // loop_pre_header
      _
    $region3: #{tpu_custom_call.1} parent=1 // loop_header
      %s23 = sphi 0, %s27
      %p24 = scmp.ge.s32.totalorder %s23, 4
      %s30 = sphi 0, %s42
      %s31 = sphi 0, %s38
      %s32 = sphi 0, %s30
      %s33 = sphi 0, %s31
      %s34 = sphi 0, %s32
      %s35 = sphi 0, %s33
      %s47 = sphi 0, %s49
      %s50 = sphi 0, %s47
      %s51 = sphi 0, %s50
      %s67 = sphi 0, %s51
      %s71 = sphi 0, %s71
      %s73 = sphi 0, %s71
      %s74 = sphi 0, %s73
      %s88 = sphi 0, %s74
      %s92 = sphi 0, %s92
      %s94 = sphi 0, %s92
      %s95 = sphi 0, %s94
      %s109 = sphi 0, %s95
      %s113 = sphi 0, %s113
      %s115 = sphi 0, %s113
      %s116 = sphi 0, %s115
      %s130 = sphi 0, %s116
      %s134 = sphi 0, %s134
      %s136 = sphi 0, %s134
      %s137 = sphi 0, %s136
      %s151 = sphi 0, %s137
      %s159 = sphi 0, %s161
      %s162 = sphi 0, %s159
      %s163 = sphi 0, %s162
      %s179 = sphi 0, %s163
      %s187 = sphi 0, %s189
      %s190 = sphi 0, %s187
      %s191 = sphi 0, %s190
      %s207 = sphi 0, %s191
    $region4: #{tpu_custom_call.1} parent=1 // loop_header_branch
      %26 = sbr.rel (%p24) target = $region8
    $region5: #{tpu_custom_call.1} parent=1 // loop_body
      %s28 = ssub.s32 %s23, 1
      %s29 = ssub.s32 %s23, 2
      %s36 = sadd.s32 1, %s31
      %p37 = scmp.ge.s32.totalorder %s36, 1
      %s38 = scalar_select %p37, 0, %s36
      %s39 = sadd.s32 1, %s30
      %s40 = scalar_select %p37, %s39, %s30
      %p41 = scmp.ge.s32.totalorder %s40, 2
      %s42 = scalar_select %p41, 0, %s40
      %s43 = ssub.s32 %s30, %s42
      %s44 = ssub.s32 %s31, %s38
      %s45 = sor.u32 %s43, %s44
      %p46 = scmp.eq.s32.totalorder %s45, 0
      %s48 = sadd.s32 %s47, 1
      %s49 = scalar_select %p46, %s47, %s48
      %p52 = pneg %p46
      %p53 = scmp.eq.s32.totalorder %s23, 1
      %p54 = por %p52, %p53
      %p55 = scmp.ne.s32.totalorder %s47, %s50
      %p56 = scmp.eq.s32.totalorder %s23, 0
      %p57 = por %p55, %p56
      %p58 = scmp.ne.s32.totalorder %s47, %s50
      %p59 = scmp.eq.s32.totalorder %s28, 1
      %p60 = por %p58, %p59
      %p61 = scmp.ne.s32.totalorder %s50, %s51
      %p62 = scmp.eq.s32.totalorder %s28, 0
      %p63 = por %p61, %p62
      %p64 = scmp.ne.s32.totalorder %s50, %s51
      %p65 = scmp.eq.s32.totalorder %s29, 1
      %p66 = por %p64, %p65
      %p68 = scmp.ne.s32.totalorder %s51, %s67
      %p69 = scmp.eq.s32.totalorder %s29, 0
      %p70 = por %p68, %p69
      %s72 = sadd.s32 %s71, 1
      %p75 = scmp.eq.s32.totalorder %s23, 1
      %p76 = scmp.ne.s32.totalorder %s71, %s73
      %p77 = scmp.eq.s32.totalorder %s23, 0
      %p78 = por %p76, %p77
      %p79 = scmp.ne.s32.totalorder %s71, %s73
      %p80 = scmp.eq.s32.totalorder %s28, 1
      %p81 = por %p79, %p80
      %p82 = scmp.ne.s32.totalorder %s73, %s74
      %p83 = scmp.eq.s32.totalorder %s28, 0
      %p84 = por %p82, %p83
      %p85 = scmp.ne.s32.totalorder %s73, %s74
      %p86 = scmp.eq.s32.totalorder %s29, 1
      %p87 = por %p85, %p86
      %p89 = scmp.ne.s32.totalorder %s74, %s88
      %p90 = scmp.eq.s32.totalorder %s29, 0
      %p91 = por %p89, %p90
      %s93 = sadd.s32 %s92, 1
      %p96 = scmp.eq.s32.totalorder %s23, 1
      %p97 = scmp.ne.s32.totalorder %s92, %s94
      %p98 = scmp.eq.s32.totalorder %s23, 0
      %p99 = por %p97, %p98
      %p100 = scmp.ne.s32.totalorder %s92, %s94
      %p101 = scmp.eq.s32.totalorder %s28, 1
      %p102 = por %p100, %p101
      %p103 = scmp.ne.s32.totalorder %s94, %s95
      %p104 = scmp.eq.s32.totalorder %s28, 0
      %p105 = por %p103, %p104
      %p106 = scmp.ne.s32.totalorder %s94, %s95
      %p107 = scmp.eq.s32.totalorder %s29, 1
      %p108 = por %p106, %p107
      %p110 = scmp.ne.s32.totalorder %s95, %s109
      %p111 = scmp.eq.s32.totalorder %s29, 0
      %p112 = por %p110, %p111
      %s114 = sadd.s32 %s113, 1
      %p117 = scmp.eq.s32.totalorder %s23, 1
      %p118 = scmp.ne.s32.totalorder %s113, %s115
      %p119 = scmp.eq.s32.totalorder %s23, 0
      %p120 = por %p118, %p119
      %p121 = scmp.ne.s32.totalorder %s113, %s115
      %p122 = scmp.eq.s32.totalorder %s28, 1
      %p123 = por %p121, %p122
      %p124 = scmp.ne.s32.totalorder %s115, %s116
      %p125 = scmp.eq.s32.totalorder %s28, 0
      %p126 = por %p124, %p125
      %p127 = scmp.ne.s32.totalorder %s115, %s116
      %p128 = scmp.eq.s32.totalorder %s29, 1
      %p129 = por %p127, %p128
      %p131 = scmp.ne.s32.totalorder %s116, %s130
      %p132 = scmp.eq.s32.totalorder %s29, 0
      %p133 = por %p131, %p132
      %s135 = sadd.s32 %s134, 1
      %p138 = scmp.eq.s32.totalorder %s23, 1
      %p139 = scmp.ne.s32.totalorder %s134, %s136
      %p140 = scmp.eq.s32.totalorder %s23, 0
      %p141 = por %p139, %p140
      %p142 = scmp.ne.s32.totalorder %s134, %s136
      %p143 = scmp.eq.s32.totalorder %s28, 1
      %p144 = por %p142, %p143
      %p145 = scmp.ne.s32.totalorder %s136, %s137
      %p146 = scmp.eq.s32.totalorder %s28, 0
      %p147 = por %p145, %p146
      %p148 = scmp.ne.s32.totalorder %s136, %s137
      %p149 = scmp.eq.s32.totalorder %s29, 1
      %p150 = por %p148, %p149
      %p152 = scmp.ne.s32.totalorder %s137, %s151
      %p153 = scmp.eq.s32.totalorder %s29, 0
      %p154 = por %p152, %p153
      %s155 = ssub.s32 %s30, %s42
      %s156 = ssub.s32 %s31, %s38
      %s157 = sor.u32 %s155, %s156
      %p158 = scmp.eq.s32.totalorder %s157, 0
      %s160 = sadd.s32 %s159, 1
      %s161 = scalar_select %p158, %s159, %s160
      %p164 = pneg %p158
      %p165 = scmp.eq.s32.totalorder %s23, 1
      %p166 = por %p164, %p165
      %p167 = scmp.ne.s32.totalorder %s159, %s162
      %p168 = scmp.eq.s32.totalorder %s23, 0
      %p169 = por %p167, %p168
      %p170 = scmp.ne.s32.totalorder %s159, %s162
      %p171 = scmp.eq.s32.totalorder %s28, 1
      %p172 = por %p170, %p171
      %p173 = scmp.ne.s32.totalorder %s162, %s163
      %p174 = scmp.eq.s32.totalorder %s28, 0
      %p175 = por %p173, %p174
      %p176 = scmp.ne.s32.totalorder %s162, %s163
      %p177 = scmp.eq.s32.totalorder %s29, 1
      %p178 = por %p176, %p177
      %p180 = scmp.ne.s32.totalorder %s163, %s179
      %p181 = scmp.eq.s32.totalorder %s29, 0
      %p182 = por %p180, %p181
      %s183 = ssub.s32 %s30, %s42
      %s184 = ssub.s32 %s31, %s38
      %s185 = sor.u32 %s183, %s184
      %p186 = scmp.eq.s32.totalorder %s185, 0
      %s188 = sadd.s32 %s187, 1
      %s189 = scalar_select %p186, %s187, %s188
      %p192 = pneg %p186
      %p193 = scmp.eq.s32.totalorder %s23, 1
      %p194 = por %p192, %p193
      %p195 = scmp.ne.s32.totalorder %s187, %s190
      %p196 = scmp.eq.s32.totalorder %s23, 0
      %p197 = por %p195, %p196
      %p198 = scmp.ne.s32.totalorder %s187, %s190
      %p199 = scmp.eq.s32.totalorder %s28, 1
      %p200 = por %p198, %p199
      %p201 = scmp.ne.s32.totalorder %s190, %s191
      %p202 = scmp.eq.s32.totalorder %s28, 0
      %p203 = por %p201, %p202
      %p204 = scmp.ne.s32.totalorder %s190, %s191
      %p205 = scmp.eq.s32.totalorder %s29, 1
      %p206 = por %p204, %p205
      %p208 = scmp.ne.s32.totalorder %s191, %s207
      %p209 = scmp.eq.s32.totalorder %s29, 0
      %p210 = por %p208, %p209
      %p211 = scmp.le.s32.totalorder 1, %s23
      %p212 = scmp.lt.s32.totalorder %s23, 3
      %p213 = pnand %p211, %p212
      %p214 = pneg %p213
      // Predicated region
      $region9: #{tpu_custom_call.1} parent=5 // pred_check
        _
      $region10: #{tpu_custom_call.1} parent=5 // pred_check_branch
        %216 = sbr.rel (%p213) target = $region12
      $region11: #{tpu_custom_call.1} parent=5 // pred_region
        %s217 = ssub.s32 %s23, 1
        // Predicated region
        $region13: #{tpu_custom_call.1} parent=11 // pred_check
          %p218 = pneg %p84
        $region14: #{tpu_custom_call.1} parent=11 // pred_check_branch
          %220 = sbr.rel (%p218) target = $region16
        $region15: #{tpu_custom_call.1} parent=11 // pred_region
          _
        $region16: #{tpu_custom_call.1} parent=11 // pred_fallthru
          _
        // Predicated region
        $region17: #{tpu_custom_call.1} parent=11 // pred_check
          %p221 = pneg %p105
        $region18: #{tpu_custom_call.1} parent=11 // pred_check_branch
          %223 = sbr.rel (%p221) target = $region20
        $region19: #{tpu_custom_call.1} parent=11 // pred_region
          _
        $region20: #{tpu_custom_call.1} parent=11 // pred_fallthru
          _
        // Predicated region
        $region21: #{tpu_custom_call.1} parent=11 // pred_check
          %p224 = pneg %p126
        $region22: #{tpu_custom_call.1} parent=11 // pred_check_branch
          %226 = sbr.rel (%p224) target = $region24
        $region23: #{tpu_custom_call.1} parent=11 // pred_region
          %s228 = ssub.s32 2048, 2048
          %229 = vsyncadd [#allocation6], %s228
          %s230 = sshll.u32 [#allocation5], 4
          %s231 = int_to_ptr.vmem [resolvable:$true] %s230
          %236 = dma.hbm_to_vmem [thread:$0]  %s3, 2048, %s231, [#allocation6], 128, 128, 8
        $region24: #{tpu_custom_call.1} parent=11 // pred_fallthru
          _
        // Predicated region
        $region25: #{tpu_custom_call.1} parent=11 // pred_check
          %p237 = pneg %p147
        $region26: #{tpu_custom_call.1} parent=11 // pred_check_branch
          %239 = sbr.rel (%p237) target = $region28
        $region27: #{tpu_custom_call.1} parent=11 // pred_region
          _
        $region28: #{tpu_custom_call.1} parent=11 // pred_fallthru
          _
      $region12: #{tpu_custom_call.1} parent=5 // pred_fallthru
        _
      %p240 = scmp.lt.s32.totalorder %s23, 2
      // Predicated region
      $region29: #{tpu_custom_call.1} parent=5 // pred_check
        %p241 = pneg %p240
      $region30: #{tpu_custom_call.1} parent=5 // pred_check_branch
        %243 = sbr.rel (%p241) target = $region32
      $region31: #{tpu_custom_call.1} parent=5 // pred_region
        // Predicated region
        $region33: #{tpu_custom_call.1} parent=31 // pred_check
          %p244 = pneg %p57
        $region34: #{tpu_custom_call.1} parent=31 // pred_check_branch
          %246 = sbr.rel (%p244) target = $region36
        $region35: #{tpu_custom_call.1} parent=31 // pred_region
          %s247 = sand.u32 %s47, 1
          %s248 = scalar_lea.sflag [#allocation3], %s247
          %s249 = sand.u32 %s47, 1
          %s250 = smul.addr %s249, 256
          %s251 = scalar_lea.vmem [#allocation2], %s250
          %s252 = smul.u32 32, %s31
          %s254 = ssub.s32 4096, 4096
          %255 = vsyncadd %s248, %s254
          %s256 = smul.addr %s30, 32
          %s257 = sadd.s32 %s252, %s256
          %s258 = smul.addr %s257, 128
          %s259 = scalar_lea.hbm %s0, %s258
          %s260 = sshll.u32 %s251, 4
          %s261 = int_to_ptr.vmem [resolvable:$true] %s260
          %266 = dma.hbm_to_vmem [thread:$0]  %s259, 4096, %s261, %s248, 128, 128, 8
        $region36: #{tpu_custom_call.1} parent=31 // pred_fallthru
          _
      $region32: #{tpu_custom_call.1} parent=5 // pred_fallthru
        _
      %p267 = scmp.le.s32.totalorder 1, %s23
      %p268 = scmp.lt.s32.totalorder %s23, 3
      %p269 = pnand %p267, %p268
      %p270 = pneg %p269
      // Predicated region
      $region37: #{tpu_custom_call.1} parent=5 // pred_check
        _
      $region38: #{tpu_custom_call.1} parent=5 // pred_check_branch
        %272 = sbr.rel (%p269) target = $region40
      $region39: #{tpu_custom_call.1} parent=5 // pred_region
        %s273 = ssub.s32 %s23, 1
        %s274 = sand.u32 %s50, 1
        %s275 = scalar_lea.sflag [#allocation3], %s274
        %s276 = sand.u32 %s50, 1
        %s277 = smul.addr %s276, 256
        %s278 = scalar_lea.vmem [#allocation2], %s277
        // Predicated region
        $region41: #{tpu_custom_call.1} parent=39 // pred_check
          %p279 = pneg %p63
        $region42: #{tpu_custom_call.1} parent=39 // pred_check_branch
          %281 = sbr.rel (%p279) target = $region44
        $region43: #{tpu_custom_call.1} parent=39 // pred_region
          %282 = dma.done %s275, 4096
        $region44: #{tpu_custom_call.1} parent=39 // pred_fallthru
          _
        // Predicated region
        $region45: #{tpu_custom_call.1} parent=39 // pred_check
          %p283 = pneg %p126
        $region46: #{tpu_custom_call.1} parent=39 // pred_check_branch
          %285 = sbr.rel (%p283) target = $region48
        $region47: #{tpu_custom_call.1} parent=39 // pred_region
          %286 = dma.done [#allocation6], 2048
        $region48: #{tpu_custom_call.1} parent=39 // pred_fallthru
          _
        %s287 = sand.u32 %s50, 1
        %s288 = scalar_lea.sflag [#allocation3], %s287
        %s289 = sand.u32 %s50, 1
        %s290 = smul.addr %s289, 256
        %s291 = scalar_lea.vmem [#allocation2], %s290
        %p292 = pneg %p63
        %p293 = pneg %p60
        %p294 = pneg %p84
        %p295 = pneg %p81
        %p296 = pneg %p105
        %p297 = pneg %p102
        %p298 = pneg %p126
        %p299 = pneg %p123
        %p300 = pneg %p147
        %p301 = pneg %p144
        %p302 = pneg %p175
        %p303 = pneg %p172
        %s304 = sand.u32 %s162, 1
        %s305 = scalar_lea.sflag [#allocation4], %s304
        %s306 = sand.u32 %s162, 1
        %s307 = smul.addr %s306, 128
        %s308 = scalar_lea.vmem [#allocation7], %s307
        %p309 = pneg %p203
        %p310 = pneg %p200
        %s311 = sand.u32 %s190, 1
        %s312 = scalar_lea.sflag [#allocation9], %s311
        %s313 = sand.u32 %s190, 1
        %s314 = smul.addr %s313, 128
        %s315 = scalar_lea.vmem [#allocation8], %s314
        %s316 = smul.u32 32, %s33
        %s317 = smul.u32 32, %s33
        %s318 = smul.u32 32, %s33
        %v320 = vld [vmem:[%s278] sm:$0xff]
        %v321 = vld [vmem:[%s278 + $0x8] sm:$0xff]
        %v322 = vld [vmem:[%s278 + $0x10] sm:$0xff]
        %v323 = vld [vmem:[%s278 + $0x18] sm:$0xff]
        %v324 = vld [vmem:[%s278 + $0x20] sm:$0xff]
        %v325 = vld [vmem:[%s278 + $0x28] sm:$0xff]
        %v326 = vld [vmem:[%s278 + $0x30] sm:$0xff]
        %v327 = vld [vmem:[%s278 + $0x38] sm:$0xff]
        %v328 = vld [vmem:[%s278 + $0x40] sm:$0xff]
        %v329 = vld [vmem:[%s278 + $0x48] sm:$0xff]
        %v330 = vld [vmem:[%s278 + $0x50] sm:$0xff]
        %v331 = vld [vmem:[%s278 + $0x58] sm:$0xff]
        %v332 = vld [vmem:[%s278 + $0x60] sm:$0xff]
        %v333 = vld [vmem:[%s278 + $0x68] sm:$0xff]
        %v334 = vld [vmem:[%s278 + $0x70] sm:$0xff]
        %v335 = vld [vmem:[%s278 + $0x78] sm:$0xff]
        %v336 = vld [vmem:[%s278 + $0x80] sm:$0xff]
        %v337 = vld [vmem:[%s278 + $0x88] sm:$0xff]
        %v338 = vld [vmem:[%s278 + $0x90] sm:$0xff]
        %v339 = vld [vmem:[%s278 + $0x98] sm:$0xff]
        %v340 = vld [vmem:[%s278 + $0xa0] sm:$0xff]
        %v341 = vld [vmem:[%s278 + $0xa8] sm:$0xff]
        %v342 = vld [vmem:[%s278 + $0xb0] sm:$0xff]
        %v343 = vld [vmem:[%s278 + $0xb8] sm:$0xff]
        %v344 = vld [vmem:[%s278 + $0xc0] sm:$0xff]
        %v345 = vld [vmem:[%s278 + $0xc8] sm:$0xff]
        %v346 = vld [vmem:[%s278 + $0xd0] sm:$0xff]
        %v347 = vld [vmem:[%s278 + $0xd8] sm:$0xff]
        %v348 = vld [vmem:[%s278 + $0xe0] sm:$0xff]
        %v349 = vld [vmem:[%s278 + $0xe8] sm:$0xff]
        %v350 = vld [vmem:[%s278 + $0xf0] sm:$0xff]
        %v351 = vld [vmem:[%s278 + $0xf8] sm:$0xff]
        %v352 = vld [vmem:[%s1] sm:$0x1]
        %v353 = vld [vmem:[%s2] sm:$0x1]
        %354 = vadd.xlane.f32.xlu0 %v320
        %v355 = vpop.xlane.xlu0 %354
        %356 = vadd.xlane.f32.xlu0 %v321
        %v357 = vpop.xlane.xlu0 %356
        %358 = vadd.xlane.f32.xlu0 %v322
        %v359 = vpop.xlane.xlu0 %358
        %360 = vadd.xlane.f32.xlu0 %v323
        %v361 = vpop.xlane.xlu0 %360
        %362 = vadd.xlane.f32.xlu0 %v324
        %v363 = vpop.xlane.xlu0 %362
        %364 = vadd.xlane.f32.xlu0 %v325
        %v365 = vpop.xlane.xlu0 %364
        %366 = vadd.xlane.f32.xlu0 %v326
        %v367 = vpop.xlane.xlu0 %366
        %368 = vadd.xlane.f32.xlu0 %v327
        %v369 = vpop.xlane.xlu0 %368
        %370 = vadd.xlane.f32.xlu0 %v328
        %v371 = vpop.xlane.xlu0 %370
        %372 = vadd.xlane.f32.xlu0 %v329
        %v373 = vpop.xlane.xlu0 %372
        %374 = vadd.xlane.f32.xlu0 %v330
        %v375 = vpop.xlane.xlu0 %374
        %376 = vadd.xlane.f32.xlu0 %v331
        %v377 = vpop.xlane.xlu0 %376
        %378 = vadd.xlane.f32.xlu0 %v332
        %v379 = vpop.xlane.xlu0 %378
        %380 = vadd.xlane.f32.xlu0 %v333
        %v381 = vpop.xlane.xlu0 %380
        %382 = vadd.xlane.f32.xlu0 %v334
        %v383 = vpop.xlane.xlu0 %382
        %384 = vadd.xlane.f32.xlu0 %v335
        %v385 = vpop.xlane.xlu0 %384
        %386 = vadd.xlane.f32.xlu0 %v336
        %v387 = vpop.xlane.xlu0 %386
        %388 = vadd.xlane.f32.xlu0 %v337
        %v389 = vpop.xlane.xlu0 %388
        %390 = vadd.xlane.f32.xlu0 %v338
        %v391 = vpop.xlane.xlu0 %390
        %392 = vadd.xlane.f32.xlu0 %v339
        %v393 = vpop.xlane.xlu0 %392
        %394 = vadd.xlane.f32.xlu0 %v340
        %v395 = vpop.xlane.xlu0 %394
        %396 = vadd.xlane.f32.xlu0 %v341
        %v397 = vpop.xlane.xlu0 %396
        %398 = vadd.xlane.f32.xlu0 %v342
        %v399 = vpop.xlane.xlu0 %398
        %400 = vadd.xlane.f32.xlu0 %v343
        %v401 = vpop.xlane.xlu0 %400
        %402 = vadd.xlane.f32.xlu0 %v344
        %v403 = vpop.xlane.xlu0 %402
        %404 = vadd.xlane.f32.xlu0 %v345
        %v405 = vpop.xlane.xlu0 %404
        %406 = vadd.xlane.f32.xlu0 %v346
        %v407 = vpop.xlane.xlu0 %406
        %408 = vadd.xlane.f32.xlu0 %v347
        %v409 = vpop.xlane.xlu0 %408
        %410 = vadd.xlane.f32.xlu0 %v348
        %v411 = vpop.xlane.xlu0 %410
        %412 = vadd.xlane.f32.xlu0 %v349
        %v413 = vpop.xlane.xlu0 %412
        %414 = vadd.xlane.f32.xlu0 %v350
        %v415 = vpop.xlane.xlu0 %414
        %416 = vadd.xlane.f32.xlu0 %v351
        %v417 = vpop.xlane.xlu0 %416
        %v418 = vrcp.pop 128.0
        %v419 = vmul.f32 %v355, %v418
        %v420 = vmul.f32 %v357, %v418
        %v421 = vmul.f32 %v359, %v418
        %v422 = vmul.f32 %v361, %v418
        %v423 = vmul.f32 %v363, %v418
        %v424 = vmul.f32 %v365, %v418
        %v425 = vmul.f32 %v367, %v418
        %v426 = vmul.f32 %v369, %v418
        %v427 = vmul.f32 %v371, %v418
        %v428 = vmul.f32 %v373, %v418
        %v429 = vmul.f32 %v375, %v418
        %v430 = vmul.f32 %v377, %v418
        %v431 = vmul.f32 %v379, %v418
        %v432 = vmul.f32 %v381, %v418
        %v433 = vmul.f32 %v383, %v418
        %v434 = vmul.f32 %v385, %v418
        %v435 = vmul.f32 %v387, %v418
        %v436 = vmul.f32 %v389, %v418
        %v437 = vmul.f32 %v391, %v418
        %v438 = vmul.f32 %v393, %v418
        %v439 = vmul.f32 %v395, %v418
        %v440 = vmul.f32 %v397, %v418
        %v441 = vmul.f32 %v399, %v418
        %v442 = vmul.f32 %v401, %v418
        %v443 = vmul.f32 %v403, %v418
        %v444 = vmul.f32 %v405, %v418
        %v445 = vmul.f32 %v407, %v418
        %v446 = vmul.f32 %v409, %v418
        %v447 = vmul.f32 %v411, %v418
        %v448 = vmul.f32 %v413, %v418
        %v449 = vmul.f32 %v415, %v418
        %v450 = vmul.f32 %v417, %v418
        %v451 = vsub.f32 %v320, %v419
        %v452 = vsub.f32 %v321, %v420
        %v453 = vsub.f32 %v322, %v421
        %v454 = vsub.f32 %v323, %v422
        %v455 = vsub.f32 %v324, %v423
        %v456 = vsub.f32 %v325, %v424
        %v457 = vsub.f32 %v326, %v425
        %v458 = vsub.f32 %v327, %v426
        %v459 = vsub.f32 %v328, %v427
        %v460 = vsub.f32 %v329, %v428
        %v461 = vsub.f32 %v330, %v429
        %v462 = vsub.f32 %v331, %v430
        %v463 = vsub.f32 %v332, %v431
        %v464 = vsub.f32 %v333, %v432
        %v465 = vsub.f32 %v334, %v433
        %v466 = vsub.f32 %v335, %v434
        %v467 = vsub.f32 %v336, %v435
        %v468 = vsub.f32 %v337, %v436
        %v469 = vsub.f32 %v338, %v437
        %v470 = vsub.f32 %v339, %v438
        %v471 = vsub.f32 %v340, %v439
        %v472 = vsub.f32 %v341, %v440
        %v473 = vsub.f32 %v342, %v441
        %v474 = vsub.f32 %v343, %v442
        %v475 = vsub.f32 %v344, %v443
        %v476 = vsub.f32 %v345, %v444
        %v477 = vsub.f32 %v346, %v445
        %v478 = vsub.f32 %v347, %v446
        %v479 = vsub.f32 %v348, %v447
        %v480 = vsub.f32 %v349, %v448
        %v481 = vsub.f32 %v350, %v449
        %v482 = vsub.f32 %v351, %v450
        %v483 = vmul.f32 %v451, %v451
        %v484 = vmul.f32 %v452, %v452
        %v485 = vmul.f32 %v453, %v453
        %v486 = vmul.f32 %v454, %v454
        %v487 = vmul.f32 %v455, %v455
        %v488 = vmul.f32 %v456, %v456
        %v489 = vmul.f32 %v457, %v457
        %v490 = vmul.f32 %v458, %v458
        %v491 = vmul.f32 %v459, %v459
        %v492 = vmul.f32 %v460, %v460
        %v493 = vmul.f32 %v461, %v461
        %v494 = vmul.f32 %v462, %v462
        %v495 = vmul.f32 %v463, %v463
        %v496 = vmul.f32 %v464, %v464
        %v497 = vmul.f32 %v465, %v465
        %v498 = vmul.f32 %v466, %v466
        %v499 = vmul.f32 %v467, %v467
        %v500 = vmul.f32 %v468, %v468
        %v501 = vmul.f32 %v469, %v469
        %v502 = vmul.f32 %v470, %v470
        %v503 = vmul.f32 %v471, %v471
        %v504 = vmul.f32 %v472, %v472
        %v505 = vmul.f32 %v473, %v473
        %v506 = vmul.f32 %v474, %v474
        %v507 = vmul.f32 %v475, %v475
        %v508 = vmul.f32 %v476, %v476
        %v509 = vmul.f32 %v477, %v477
        %v510 = vmul.f32 %v478, %v478
        %v511 = vmul.f32 %v479, %v479
        %v512 = vmul.f32 %v480, %v480
        %v513 = vmul.f32 %v481, %v481
        %v514 = vmul.f32 %v482, %v482
        %515 = vadd.xlane.f32.xlu0 %v483
        %v516 = vpop.xlane.xlu0 %515
        %517 = vadd.xlane.f32.xlu0 %v484
        %v518 = vpop.xlane.xlu0 %517
        %519 = vadd.xlane.f32.xlu0 %v485
        %v520 = vpop.xlane.xlu0 %519
        %521 = vadd.xlane.f32.xlu0 %v486
        %v522 = vpop.xlane.xlu0 %521
        %523 = vadd.xlane.f32.xlu0 %v487
        %v524 = vpop.xlane.xlu0 %523
        %525 = vadd.xlane.f32.xlu0 %v488
        %v526 = vpop.xlane.xlu0 %525
        %527 = vadd.xlane.f32.xlu0 %v489
        %v528 = vpop.xlane.xlu0 %527
        %529 = vadd.xlane.f32.xlu0 %v490
        %v530 = vpop.xlane.xlu0 %529
        %531 = vadd.xlane.f32.xlu0 %v491
        %v532 = vpop.xlane.xlu0 %531
        %533 = vadd.xlane.f32.xlu0 %v492
        %v534 = vpop.xlane.xlu0 %533
        %535 = vadd.xlane.f32.xlu0 %v493
        %v536 = vpop.xlane.xlu0 %535
        %537 = vadd.xlane.f32.xlu0 %v494
        %v538 = vpop.xlane.xlu0 %537
        %539 = vadd.xlane.f32.xlu0 %v495
        %v540 = vpop.xlane.xlu0 %539
        %541 = vadd.xlane.f32.xlu0 %v496
        %v542 = vpop.xlane.xlu0 %541
        %543 = vadd.xlane.f32.xlu0 %v497
        %v544 = vpop.xlane.xlu0 %543
        %545 = vadd.xlane.f32.xlu0 %v498
        %v546 = vpop.xlane.xlu0 %545
        %547 = vadd.xlane.f32.xlu0 %v499
        %v548 = vpop.xlane.xlu0 %547
        %549 = vadd.xlane.f32.xlu0 %v500
        %v550 = vpop.xlane.xlu0 %549
        %551 = vadd.xlane.f32.xlu0 %v501
        %v552 = vpop.xlane.xlu0 %551
        %553 = vadd.xlane.f32.xlu0 %v502
        %v554 = vpop.xlane.xlu0 %553
        %555 = vadd.xlane.f32.xlu0 %v503
        %v556 = vpop.xlane.xlu0 %555
        %557 = vadd.xlane.f32.xlu0 %v504
        %v558 = vpop.xlane.xlu0 %557
        %559 = vadd.xlane.f32.xlu0 %v505
        %v560 = vpop.xlane.xlu0 %559
        %561 = vadd.xlane.f32.xlu0 %v506
        %v562 = vpop.xlane.xlu0 %561
        %563 = vadd.xlane.f32.xlu0 %v507
        %v564 = vpop.xlane.xlu0 %563
        %565 = vadd.xlane.f32.xlu0 %v508
        %v566 = vpop.xlane.xlu0 %565
        %567 = vadd.xlane.f32.xlu0 %v509
        %v568 = vpop.xlane.xlu0 %567
        %569 = vadd.xlane.f32.xlu0 %v510
        %v570 = vpop.xlane.xlu0 %569
        %571 = vadd.xlane.f32.xlu0 %v511
        %v572 = vpop.xlane.xlu0 %571
        %573 = vadd.xlane.f32.xlu0 %v512
        %v574 = vpop.xlane.xlu0 %573
        %575 = vadd.xlane.f32.xlu0 %v513
        %v576 = vpop.xlane.xlu0 %575
        %577 = vadd.xlane.f32.xlu0 %v514
        %v578 = vpop.xlane.xlu0 %577
        %v579 = vmul.f32 %v516, 0.007874016
        %v580 = vmul.f32 %v518, 0.007874016
        %v581 = vmul.f32 %v520, 0.007874016
        %v582 = vmul.f32 %v522, 0.007874016
        %v583 = vmul.f32 %v524, 0.007874016
        %v584 = vmul.f32 %v526, 0.007874016
        %v585 = vmul.f32 %v528, 0.007874016
        %v586 = vmul.f32 %v530, 0.007874016
        %v587 = vmul.f32 %v532, 0.007874016
        %v588 = vmul.f32 %v534, 0.007874016
        %v589 = vmul.f32 %v536, 0.007874016
        %v590 = vmul.f32 %v538, 0.007874016
        %v591 = vmul.f32 %v540, 0.007874016
        %v592 = vmul.f32 %v542, 0.007874016
        %v593 = vmul.f32 %v544, 0.007874016
        %v594 = vmul.f32 %v546, 0.007874016
        %v595 = vmul.f32 %v548, 0.007874016
        %v596 = vmul.f32 %v550, 0.007874016
        %v597 = vmul.f32 %v552, 0.007874016
        %v598 = vmul.f32 %v554, 0.007874016
        %v599 = vmul.f32 %v556, 0.007874016
        %v600 = vmul.f32 %v558, 0.007874016
        %v601 = vmul.f32 %v560, 0.007874016
        %v602 = vmul.f32 %v562, 0.007874016
        %v603 = vmul.f32 %v564, 0.007874016
        %v604 = vmul.f32 %v566, 0.007874016
        %v605 = vmul.f32 %v568, 0.007874016
        %v606 = vmul.f32 %v570, 0.007874016
        %v607 = vmul.f32 %v572, 0.007874016
        %v608 = vmul.f32 %v574, 0.007874016
        %v609 = vmul.f32 %v576, 0.007874016
        %v610 = vmul.f32 %v578, 0.007874016
        %v612 = vlaneseq
        %v613 = vshrl.u32 %v612, 7
        %v614 = vsub.s32 0, %v613
        %v615 = vrot.slane %v352, %v614
        %v617 = vmul.f32 %v615, %v451
        %v618 = vmul.f32 %v615, %v452
        %v619 = vmul.f32 %v615, %v453
        %v620 = vmul.f32 %v615, %v454
        %v621 = vmul.f32 %v615, %v455
        %v622 = vmul.f32 %v615, %v456
        %v623 = vmul.f32 %v615, %v457
        %v624 = vmul.f32 %v615, %v458
        %v625 = vmul.f32 %v615, %v459
        %v626 = vmul.f32 %v615, %v460
        %v627 = vmul.f32 %v615, %v461
        %v628 = vmul.f32 %v615, %v462
        %v629 = vmul.f32 %v615, %v463
        %v630 = vmul.f32 %v615, %v464
        %v631 = vmul.f32 %v615, %v465
        %v632 = vmul.f32 %v615, %v466
        %v633 = vmul.f32 %v615, %v467
        %v634 = vmul.f32 %v615, %v468
        %v635 = vmul.f32 %v615, %v469
        %v636 = vmul.f32 %v615, %v470
        %v637 = vmul.f32 %v615, %v471
        %v638 = vmul.f32 %v615, %v472
        %v639 = vmul.f32 %v615, %v473
        %v640 = vmul.f32 %v615, %v474
        %v641 = vmul.f32 %v615, %v475
        %v642 = vmul.f32 %v615, %v476
        %v643 = vmul.f32 %v615, %v477
        %v644 = vmul.f32 %v615, %v478
        %v645 = vmul.f32 %v615, %v479
        %v646 = vmul.f32 %v615, %v480
        %v647 = vmul.f32 %v615, %v481
        %v648 = vmul.f32 %v615, %v482
        %v649 = vrsqrt.pop %v579
        %v650 = vmul.f32 %v579, %v649
        %vm651 = vcmp.eq.f32.partialorder %v579, inf
        %v652 = vsel %vm651, %v579, %v650
        %vm653 = vcmp.eq.f32.partialorder %v579, 0.0
        %v654 = vand.u32 %v579, 2147483648
        %v655 = vsel %vm653, %v654, %v652
        %v656 = vrsqrt.pop %v580
        %v657 = vmul.f32 %v580, %v656
        %vm658 = vcmp.eq.f32.partialorder %v580, inf
        %v659 = vsel %vm658, %v580, %v657
        %vm660 = vcmp.eq.f32.partialorder %v580, 0.0
        %v661 = vand.u32 %v580, 2147483648
        %v662 = vsel %vm660, %v661, %v659
        %v663 = vrsqrt.pop %v581
        %v664 = vmul.f32 %v581, %v663
        %vm665 = vcmp.eq.f32.partialorder %v581, inf
        %v666 = vsel %vm665, %v581, %v664
        %vm667 = vcmp.eq.f32.partialorder %v581, 0.0
        %v668 = vand.u32 %v581, 2147483648
        %v669 = vsel %vm667, %v668, %v666
        %v670 = vrsqrt.pop %v582
        %v671 = vmul.f32 %v582, %v670
        %vm672 = vcmp.eq.f32.partialorder %v582, inf
        %v673 = vsel %vm672, %v582, %v671
        %vm674 = vcmp.eq.f32.partialorder %v582, 0.0
        %v675 = vand.u32 %v582, 2147483648
        %v676 = vsel %vm674, %v675, %v673
        %v677 = vrsqrt.pop %v583
        %v678 = vmul.f32 %v583, %v677
        %vm679 = vcmp.eq.f32.partialorder %v583, inf
        %v680 = vsel %vm679, %v583, %v678
        %vm681 = vcmp.eq.f32.partialorder %v583, 0.0
        %v682 = vand.u32 %v583, 2147483648
        %v683 = vsel %vm681, %v682, %v680
        %v684 = vrsqrt.pop %v584
        %v685 = vmul.f32 %v584, %v684
        %vm686 = vcmp.eq.f32.partialorder %v584, inf
        %v687 = vsel %vm686, %v584, %v685
        %vm688 = vcmp.eq.f32.partialorder %v584, 0.0
        %v689 = vand.u32 %v584, 2147483648
        %v690 = vsel %vm688, %v689, %v687
        %v691 = vrsqrt.pop %v585
        %v692 = vmul.f32 %v585, %v691
        %vm693 = vcmp.eq.f32.partialorder %v585, inf
        %v694 = vsel %vm693, %v585, %v692
        %vm695 = vcmp.eq.f32.partialorder %v585, 0.0
        %v696 = vand.u32 %v585, 2147483648
        %v697 = vsel %vm695, %v696, %v694
        %v698 = vrsqrt.pop %v586
        %v699 = vmul.f32 %v586, %v698
        %vm700 = vcmp.eq.f32.partialorder %v586, inf
        %v701 = vsel %vm700, %v586, %v699
        %vm702 = vcmp.eq.f32.partialorder %v586, 0.0
        %v703 = vand.u32 %v586, 2147483648
        %v704 = vsel %vm702, %v703, %v701
        %v705 = vrsqrt.pop %v587
        %v706 = vmul.f32 %v587, %v705
        %vm707 = vcmp.eq.f32.partialorder %v587, inf
        %v708 = vsel %vm707, %v587, %v706
        %vm709 = vcmp.eq.f32.partialorder %v587, 0.0
        %v710 = vand.u32 %v587, 2147483648
        %v711 = vsel %vm709, %v710, %v708
        %v712 = vrsqrt.pop %v588
        %v713 = vmul.f32 %v588, %v712
        %vm714 = vcmp.eq.f32.partialorder %v588, inf
        %v715 = vsel %vm714, %v588, %v713
        %vm716 = vcmp.eq.f32.partialorder %v588, 0.0
        %v717 = vand.u32 %v588, 2147483648
        %v718 = vsel %vm716, %v717, %v715
        %v719 = vrsqrt.pop %v589
        %v720 = vmul.f32 %v589, %v719
        %vm721 = vcmp.eq.f32.partialorder %v589, inf
        %v722 = vsel %vm721, %v589, %v720
        %vm723 = vcmp.eq.f32.partialorder %v589, 0.0
        %v724 = vand.u32 %v589, 2147483648
        %v725 = vsel %vm723, %v724, %v722
        %v726 = vrsqrt.pop %v590
        %v727 = vmul.f32 %v590, %v726
        %vm728 = vcmp.eq.f32.partialorder %v590, inf
        %v729 = vsel %vm728, %v590, %v727
        %vm730 = vcmp.eq.f32.partialorder %v590, 0.0
        %v731 = vand.u32 %v590, 2147483648
        %v732 = vsel %vm730, %v731, %v729
        %v733 = vrsqrt.pop %v591
        %v734 = vmul.f32 %v591, %v733
        %vm735 = vcmp.eq.f32.partialorder %v591, inf
        %v736 = vsel %vm735, %v591, %v734
        %vm737 = vcmp.eq.f32.partialorder %v591, 0.0
        %v738 = vand.u32 %v591, 2147483648
        %v739 = vsel %vm737, %v738, %v736
        %v740 = vrsqrt.pop %v592
        %v741 = vmul.f32 %v592, %v740
        %vm742 = vcmp.eq.f32.partialorder %v592, inf
        %v743 = vsel %vm742, %v592, %v741
        %vm744 = vcmp.eq.f32.partialorder %v592, 0.0
        %v745 = vand.u32 %v592, 2147483648
        %v746 = vsel %vm744, %v745, %v743
        %v747 = vrsqrt.pop %v593
        %v748 = vmul.f32 %v593, %v747
        %vm749 = vcmp.eq.f32.partialorder %v593, inf
        %v750 = vsel %vm749, %v593, %v748
        %vm751 = vcmp.eq.f32.partialorder %v593, 0.0
        %v752 = vand.u32 %v593, 2147483648
        %v753 = vsel %vm751, %v752, %v750
        %v754 = vrsqrt.pop %v594
        %v755 = vmul.f32 %v594, %v754
        %vm756 = vcmp.eq.f32.partialorder %v594, inf
        %v757 = vsel %vm756, %v594, %v755
        %vm758 = vcmp.eq.f32.partialorder %v594, 0.0
        %v759 = vand.u32 %v594, 2147483648
        %v760 = vsel %vm758, %v759, %v757
        %v761 = vrsqrt.pop %v595
        %v762 = vmul.f32 %v595, %v761
        %vm763 = vcmp.eq.f32.partialorder %v595, inf
        %v764 = vsel %vm763, %v595, %v762
        %vm765 = vcmp.eq.f32.partialorder %v595, 0.0
        %v766 = vand.u32 %v595, 2147483648
        %v767 = vsel %vm765, %v766, %v764
        %v768 = vrsqrt.pop %v596
        %v769 = vmul.f32 %v596, %v768
        %vm770 = vcmp.eq.f32.partialorder %v596, inf
        %v771 = vsel %vm770, %v596, %v769
        %vm772 = vcmp.eq.f32.partialorder %v596, 0.0
        %v773 = vand.u32 %v596, 2147483648
        %v774 = vsel %vm772, %v773, %v771
        %v775 = vrsqrt.pop %v597
        %v776 = vmul.f32 %v597, %v775
        %vm777 = vcmp.eq.f32.partialorder %v597, inf
        %v778 = vsel %vm777, %v597, %v776
        %vm779 = vcmp.eq.f32.partialorder %v597, 0.0
        %v780 = vand.u32 %v597, 2147483648
        %v781 = vsel %vm779, %v780, %v778
        %v782 = vrsqrt.pop %v598
        %v783 = vmul.f32 %v598, %v782
        %vm784 = vcmp.eq.f32.partialorder %v598, inf
        %v785 = vsel %vm784, %v598, %v783
        %vm786 = vcmp.eq.f32.partialorder %v598, 0.0
        %v787 = vand.u32 %v598, 2147483648
        %v788 = vsel %vm786, %v787, %v785
        %v789 = vrsqrt.pop %v599
        %v790 = vmul.f32 %v599, %v789
        %vm791 = vcmp.eq.f32.partialorder %v599, inf
        %v792 = vsel %vm791, %v599, %v790
        %vm793 = vcmp.eq.f32.partialorder %v599, 0.0
        %v794 = vand.u32 %v599, 2147483648
        %v795 = vsel %vm793, %v794, %v792
        %v796 = vrsqrt.pop %v600
        %v797 = vmul.f32 %v600, %v796
        %vm798 = vcmp.eq.f32.partialorder %v600, inf
        %v799 = vsel %vm798, %v600, %v797
        %vm800 = vcmp.eq.f32.partialorder %v600, 0.0
        %v801 = vand.u32 %v600, 2147483648
        %v802 = vsel %vm800, %v801, %v799
        %v803 = vrsqrt.pop %v601
        %v804 = vmul.f32 %v601, %v803
        %vm805 = vcmp.eq.f32.partialorder %v601, inf
        %v806 = vsel %vm805, %v601, %v804
        %vm807 = vcmp.eq.f32.partialorder %v601, 0.0
        %v808 = vand.u32 %v601, 2147483648
        %v809 = vsel %vm807, %v808, %v806
        %v810 = vrsqrt.pop %v602
        %v811 = vmul.f32 %v602, %v810
        %vm812 = vcmp.eq.f32.partialorder %v602, inf
        %v813 = vsel %vm812, %v602, %v811
        %vm814 = vcmp.eq.f32.partialorder %v602, 0.0
        %v815 = vand.u32 %v602, 2147483648
        %v816 = vsel %vm814, %v815, %v813
        %v817 = vrsqrt.pop %v603
        %v818 = vmul.f32 %v603, %v817
        %vm819 = vcmp.eq.f32.partialorder %v603, inf
        %v820 = vsel %vm819, %v603, %v818
        %vm821 = vcmp.eq.f32.partialorder %v603, 0.0
        %v822 = vand.u32 %v603, 2147483648
        %v823 = vsel %vm821, %v822, %v820
        %v824 = vrsqrt.pop %v604
        %v825 = vmul.f32 %v604, %v824
        %vm826 = vcmp.eq.f32.partialorder %v604, inf
        %v827 = vsel %vm826, %v604, %v825
        %vm828 = vcmp.eq.f32.partialorder %v604, 0.0
        %v829 = vand.u32 %v604, 2147483648
        %v830 = vsel %vm828, %v829, %v827
        %v831 = vrsqrt.pop %v605
        %v832 = vmul.f32 %v605, %v831
        %vm833 = vcmp.eq.f32.partialorder %v605, inf
        %v834 = vsel %vm833, %v605, %v832
        %vm835 = vcmp.eq.f32.partialorder %v605, 0.0
        %v836 = vand.u32 %v605, 2147483648
        %v837 = vsel %vm835, %v836, %v834
        %v838 = vrsqrt.pop %v606
        %v839 = vmul.f32 %v606, %v838
        %vm840 = vcmp.eq.f32.partialorder %v606, inf
        %v841 = vsel %vm840, %v606, %v839
        %vm842 = vcmp.eq.f32.partialorder %v606, 0.0
        %v843 = vand.u32 %v606, 2147483648
        %v844 = vsel %vm842, %v843, %v841
        %v845 = vrsqrt.pop %v607
        %v846 = vmul.f32 %v607, %v845
        %vm847 = vcmp.eq.f32.partialorder %v607, inf
        %v848 = vsel %vm847, %v607, %v846
        %vm849 = vcmp.eq.f32.partialorder %v607, 0.0
        %v850 = vand.u32 %v607, 2147483648
        %v851 = vsel %vm849, %v850, %v848
        %v852 = vrsqrt.pop %v608
        %v853 = vmul.f32 %v608, %v852
        %vm854 = vcmp.eq.f32.partialorder %v608, inf
        %v855 = vsel %vm854, %v608, %v853
        %vm856 = vcmp.eq.f32.partialorder %v608, 0.0
        %v857 = vand.u32 %v608, 2147483648
        %v858 = vsel %vm856, %v857, %v855
        %v859 = vrsqrt.pop %v609
        %v860 = vmul.f32 %v609, %v859
        %vm861 = vcmp.eq.f32.partialorder %v609, inf
        %v862 = vsel %vm861, %v609, %v860
        %vm863 = vcmp.eq.f32.partialorder %v609, 0.0
        %v864 = vand.u32 %v609, 2147483648
        %v865 = vsel %vm863, %v864, %v862
        %v866 = vrsqrt.pop %v610
        %v867 = vmul.f32 %v610, %v866
        %vm868 = vcmp.eq.f32.partialorder %v610, inf
        %v869 = vsel %vm868, %v610, %v867
        %vm870 = vcmp.eq.f32.partialorder %v610, 0.0
        %v871 = vand.u32 %v610, 2147483648
        %v872 = vsel %vm870, %v871, %v869
        %v873 = vadd.f32 %v655, 1e-06
        %v874 = vadd.f32 %v662, 1e-06
        %v875 = vadd.f32 %v669, 1e-06
        %v876 = vadd.f32 %v676, 1e-06
        %v877 = vadd.f32 %v683, 1e-06
        %v878 = vadd.f32 %v690, 1e-06
        %v879 = vadd.f32 %v697, 1e-06
        %v880 = vadd.f32 %v704, 1e-06
        %v881 = vadd.f32 %v711, 1e-06
        %v882 = vadd.f32 %v718, 1e-06
        %v883 = vadd.f32 %v725, 1e-06
        %v884 = vadd.f32 %v732, 1e-06
        %v885 = vadd.f32 %v739, 1e-06
        %v886 = vadd.f32 %v746, 1e-06
        %v887 = vadd.f32 %v753, 1e-06
        %v888 = vadd.f32 %v760, 1e-06
        %v889 = vadd.f32 %v767, 1e-06
        %v890 = vadd.f32 %v774, 1e-06
        %v891 = vadd.f32 %v781, 1e-06
        %v892 = vadd.f32 %v788, 1e-06
        %v893 = vadd.f32 %v795, 1e-06
        %v894 = vadd.f32 %v802, 1e-06
        %v895 = vadd.f32 %v809, 1e-06
        %v896 = vadd.f32 %v816, 1e-06
        %v897 = vadd.f32 %v823, 1e-06
        %v898 = vadd.f32 %v830, 1e-06
        %v899 = vadd.f32 %v837, 1e-06
        %v900 = vadd.f32 %v844, 1e-06
        %v901 = vadd.f32 %v851, 1e-06
        %v902 = vadd.f32 %v858, 1e-06
        %v903 = vadd.f32 %v865, 1e-06
        %v904 = vadd.f32 %v872, 1e-06
        %v905 = vrcp.pop %v873
        %v906 = vmul.f32 %v617, %v905
        %v907 = vrcp.pop %v874
        %v908 = vmul.f32 %v618, %v907
        %v909 = vrcp.pop %v875
        %v910 = vmul.f32 %v619, %v909
        %v911 = vrcp.pop %v876
        %v912 = vmul.f32 %v620, %v911
        %v913 = vrcp.pop %v877
        %v914 = vmul.f32 %v621, %v913
        %v915 = vrcp.pop %v878
        %v916 = vmul.f32 %v622, %v915
        %v917 = vrcp.pop %v879
        %v918 = vmul.f32 %v623, %v917
        %v919 = vrcp.pop %v880
        %v920 = vmul.f32 %v624, %v919
        %v921 = vrcp.pop %v881
        %v922 = vmul.f32 %v625, %v921
        %v923 = vrcp.pop %v882
        %v924 = vmul.f32 %v626, %v923
        %v925 = vrcp.pop %v883
        %v926 = vmul.f32 %v627, %v925
        %v927 = vrcp.pop %v884
        %v928 = vmul.f32 %v628, %v927
        %v929 = vrcp.pop %v885
        %v930 = vmul.f32 %v629, %v929
        %v931 = vrcp.pop %v886
        %v932 = vmul.f32 %v630, %v931
        %v933 = vrcp.pop %v887
        %v934 = vmul.f32 %v631, %v933
        %v935 = vrcp.pop %v888
        %v936 = vmul.f32 %v632, %v935
        %v937 = vrcp.pop %v889
        %v938 = vmul.f32 %v633, %v937
        %v939 = vrcp.pop %v890
        %v940 = vmul.f32 %v634, %v939
        %v941 = vrcp.pop %v891
        %v942 = vmul.f32 %v635, %v941
        %v943 = vrcp.pop %v892
        %v944 = vmul.f32 %v636, %v943
        %v945 = vrcp.pop %v893
        %v946 = vmul.f32 %v637, %v945
        %v947 = vrcp.pop %v894
        %v948 = vmul.f32 %v638, %v947
        %v949 = vrcp.pop %v895
        %v950 = vmul.f32 %v639, %v949
        %v951 = vrcp.pop %v896
        %v952 = vmul.f32 %v640, %v951
        %v953 = vrcp.pop %v897
        %v954 = vmul.f32 %v641, %v953
        %v955 = vrcp.pop %v898
        %v956 = vmul.f32 %v642, %v955
        %v957 = vrcp.pop %v899
        %v958 = vmul.f32 %v643, %v957
        %v959 = vrcp.pop %v900
        %v960 = vmul.f32 %v644, %v959
        %v961 = vrcp.pop %v901
        %v962 = vmul.f32 %v645, %v961
        %v963 = vrcp.pop %v902
        %v964 = vmul.f32 %v646, %v963
        %v965 = vrcp.pop %v903
        %v966 = vmul.f32 %v647, %v965
        %v967 = vrcp.pop %v904
        %v968 = vmul.f32 %v648, %v967
        %v970 = vlaneseq
        %v971 = vshrl.u32 %v970, 7
        %v972 = vsub.s32 0, %v971
        %v973 = vrot.slane %v353, %v972
        %v975 = vadd.f32 %v906, %v973
        %v976 = vadd.f32 %v908, %v973
        %v977 = vadd.f32 %v910, %v973
        %v978 = vadd.f32 %v912, %v973
        %v979 = vadd.f32 %v914, %v973
        %v980 = vadd.f32 %v916, %v973
        %v981 = vadd.f32 %v918, %v973
        %v982 = vadd.f32 %v920, %v973
        %v983 = vadd.f32 %v922, %v973
        %v984 = vadd.f32 %v924, %v973
        %v985 = vadd.f32 %v926, %v973
        %v986 = vadd.f32 %v928, %v973
        %v987 = vadd.f32 %v930, %v973
        %v988 = vadd.f32 %v932, %v973
        %v989 = vadd.f32 %v934, %v973
        %v990 = vadd.f32 %v936, %v973
        %v991 = vadd.f32 %v938, %v973
        %v992 = vadd.f32 %v940, %v973
        %v993 = vadd.f32 %v942, %v973
        %v994 = vadd.f32 %v944, %v973
        %v995 = vadd.f32 %v946, %v973
        %v996 = vadd.f32 %v948, %v973
        %v997 = vadd.f32 %v950, %v973
        %v998 = vadd.f32 %v952, %v973
        %v999 = vadd.f32 %v954, %v973
        %v1000 = vadd.f32 %v956, %v973
        %v1001 = vadd.f32 %v958, %v973
        %v1002 = vadd.f32 %v960, %v973
        %v1003 = vadd.f32 %v962, %v973
        %v1004 = vadd.f32 %v964, %v973
        %v1005 = vadd.f32 %v966, %v973
        %v1006 = vadd.f32 %v968, %v973
        %v1007 = vpack.c.bf16 %v976, %v975
        %v1008 = vpack.c.bf16 %v978, %v977
        %v1009 = vpack.c.bf16 %v980, %v979
        %v1010 = vpack.c.bf16 %v982, %v981
        %v1011 = vpack.c.bf16 %v984, %v983
        %v1012 = vpack.c.bf16 %v986, %v985
        %v1013 = vpack.c.bf16 %v988, %v987
        %v1014 = vpack.c.bf16 %v990, %v989
        %v1015 = vpack.c.bf16 %v992, %v991
        %v1016 = vpack.c.bf16 %v994, %v993
        %v1017 = vpack.c.bf16 %v996, %v995
        %v1018 = vpack.c.bf16 %v998, %v997
        %v1019 = vpack.c.bf16 %v1000, %v999
        %v1020 = vpack.c.bf16 %v1002, %v1001
        %v1021 = vpack.c.bf16 %v1004, %v1003
        %v1022 = vpack.c.bf16 %v1006, %v1005
        %v1023 = vld [vmem:[#allocation5] sm:$0xff]
        %v1024 = vld [vmem:[#allocation5 + $0x8] sm:$0xff]
        %v1025 = vld [vmem:[#allocation5 + $0x10] sm:$0xff]
        %v1026 = vld [vmem:[#allocation5 + $0x18] sm:$0xff]
        %v1027 = vld [vmem:[#allocation5 + $0x20] sm:$0xff]
        %v1028 = vld [vmem:[#allocation5 + $0x28] sm:$0xff]
        %v1029 = vld [vmem:[#allocation5 + $0x30] sm:$0xff]
        %v1030 = vld [vmem:[#allocation5 + $0x38] sm:$0xff]
        %v1031 = vld [vmem:[#allocation5 + $0x40] sm:$0xff]
        %v1032 = vld [vmem:[#allocation5 + $0x48] sm:$0xff]
        %v1033 = vld [vmem:[#allocation5 + $0x50] sm:$0xff]
        %v1034 = vld [vmem:[#allocation5 + $0x58] sm:$0xff]
        %v1035 = vld [vmem:[#allocation5 + $0x60] sm:$0xff]
        %v1036 = vld [vmem:[#allocation5 + $0x68] sm:$0xff]
        %v1037 = vld [vmem:[#allocation5 + $0x70] sm:$0xff]
        %v1038 = vld [vmem:[#allocation5 + $0x78] sm:$0xff]
        %v1039 = vld [vmem:[%s4] sm:$0x3]
        %v1041 = vlaneseq
        %v1042 = vshrl.u32 %v1041, 7
        %v1043 = vsub.s32 0, %v1042
        %v1044 = vrot.slane %v1039, %v1043
        %v1045 = vlaneseq
        %v1046 = vshrl.u32 %v1045, 7
        %v1047 = vsub.s32 1, %v1046
        %v1048 = vrot.slane %v1039, %v1047
        %v1067 = vunpack.c.l.b16 %v1023
        %v1068 = vunpack.c.h.b16 %v1023
        %v1069 = vunpack.c.l.b16 %v1024
        %v1070 = vunpack.c.h.b16 %v1024
        %v1071 = vunpack.c.l.b16 %v1025
        %v1072 = vunpack.c.h.b16 %v1025
        %v1073 = vunpack.c.l.b16 %v1026
        %v1074 = vunpack.c.h.b16 %v1026
        %v1075 = vunpack.c.l.b16 %v1027
        %v1076 = vunpack.c.h.b16 %v1027
        %v1077 = vunpack.c.l.b16 %v1028
        %v1078 = vunpack.c.h.b16 %v1028
        %v1079 = vunpack.c.l.b16 %v1029
        %v1080 = vunpack.c.h.b16 %v1029
        %v1081 = vunpack.c.l.b16 %v1030
        %v1082 = vunpack.c.h.b16 %v1030
        %v1083 = vunpack.c.l.b16 %v1031
        %v1084 = vunpack.c.h.b16 %v1031
        %v1085 = vunpack.c.l.b16 %v1032
        %v1086 = vunpack.c.h.b16 %v1032
        %v1087 = vunpack.c.l.b16 %v1033
        %v1088 = vunpack.c.h.b16 %v1033
        %v1089 = vunpack.c.l.b16 %v1034
        %v1090 = vunpack.c.h.b16 %v1034
        %v1091 = vunpack.c.l.b16 %v1035
        %v1092 = vunpack.c.h.b16 %v1035
        %v1093 = vunpack.c.l.b16 %v1036
        %v1094 = vunpack.c.h.b16 %v1036
        %v1095 = vunpack.c.l.b16 %v1037
        %v1096 = vunpack.c.h.b16 %v1037
        %v1097 = vunpack.c.l.b16 %v1038
        %v1098 = vunpack.c.h.b16 %v1038
        %v1099 = vpack.c.b16 %v1069, %v1067
        %v1100 = vpack.c.b16 %v1070, %v1068
        %v1101 = vpack.c.b16 %v1073, %v1071
        %v1102 = vpack.c.b16 %v1074, %v1072
        %v1103 = vpack.c.b16 %v1077, %v1075
        %v1104 = vpack.c.b16 %v1078, %v1076
        %v1105 = vpack.c.b16 %v1081, %v1079
        %v1106 = vpack.c.b16 %v1082, %v1080
        %v1107 = vpack.c.b16 %v1085, %v1083
        %v1108 = vpack.c.b16 %v1086, %v1084
        %v1109 = vpack.c.b16 %v1089, %v1087
        %v1110 = vpack.c.b16 %v1090, %v1088
        %v1111 = vpack.c.b16 %v1093, %v1091
        %v1112 = vpack.c.b16 %v1094, %v1092
        %v1113 = vpack.c.b16 %v1097, %v1095
        %v1114 = vpack.c.b16 %v1098, %v1096
        %1131 = vmatprep.subr.bf16.mxu0 %v1100
        %1132 = vmatpush1.bf16.msra.mxu0 %v1099
        %1133 = vmatprep.subr.bf16.mxu0 %v1102
        %1134 = vmatpush1.bf16.msra.mxu0 %v1101
        %1135 = vmatprep.subr.bf16.mxu0 %v1104
        %1136 = vmatpush1.bf16.msra.mxu0 %v1103
        %1137 = vmatprep.subr.bf16.mxu0 %v1106
        %1138 = vmatpush1.bf16.msra.mxu0 %v1105
        %1139 = vmatprep.subr.bf16.mxu0 %v1108
        %1140 = vmatpush1.bf16.msra.mxu0 %v1107
        %1141 = vmatprep.subr.bf16.mxu0 %v1110
        %1142 = vmatpush1.bf16.msra.mxu0 %v1109
        %1143 = vmatprep.subr.bf16.mxu0 %v1112
        %1144 = vmatpush1.bf16.msra.mxu0 %v1111
        %1145 = vmatprep.subr.bf16.mxu0 %v1114
        %1146 = vmatpush1.bf16.msra.mxu0 %v1113
        %1147 = vmatprep.subr.bf16.mxu0 0
        %1148 = vmatpush1.bf16.msra.mxu0 0
        %1149 = vmatprep.subr.bf16.mxu0 0
        %1150 = vmatpush1.bf16.msra.mxu0 0
        %1151 = vmatprep.subr.bf16.mxu0 0
        %1152 = vmatpush1.bf16.msra.mxu0 0
        %1153 = vmatprep.subr.bf16.mxu0 0
        %1154 = vmatpush1.bf16.msra.mxu0 0
        %1155 = vmatprep.subr.bf16.mxu0 0
        %1156 = vmatpush1.bf16.msra.mxu0 0
        %1157 = vmatprep.subr.bf16.mxu0 0
        %1158 = vmatpush1.bf16.msra.mxu0 0
        %1159 = vmatprep.subr.bf16.mxu0 0
        %1160 = vmatpush1.bf16.msra.mxu0 0
        %1161 = vmatprep.subr.bf16.mxu0 0
        %1162 = vmatpush1.bf16.msra.mxu0 0
        %1163 = vmatprep.mubr.bf16.mxu0 0
        %1164 = vmatmul.mubr.bf16.gmra.mrb[0].mxu0 %v1007
        %v1165 = vpop.f32.mrb[0].mxu0
        %v1166 = vadd.f32 %v1044, %v1165
        %v1167 = vpop.f32.mrb[0].mxu0
        %v1168 = vadd.f32 %v1048, %v1167
        %v1169 = vpop.f32.mrb[0].mxu0
        %v1170 = vadd.f32 %v1044, %v1169
        %v1171 = vpop.f32.mrb[0].mxu0
        %v1172 = vadd.f32 %v1048, %v1171
        %1173 = vmatprep.mubr.bf16.mxu0 0
        %1174 = vmatmul.mubr.bf16.gmra.mrb[0].mxu0 %v1008
        %v1175 = vpop.f32.mrb[0].mxu0
        %v1176 = vadd.f32 %v1044, %v1175
        %v1177 = vpop.f32.mrb[0].mxu0
        %v1178 = vadd.f32 %v1048, %v1177
        %v1179 = vpop.f32.mrb[0].mxu0
        %v1180 = vadd.f32 %v1044, %v1179
        %v1181 = vpop.f32.mrb[0].mxu0
        %v1182 = vadd.f32 %v1048, %v1181
        %1183 = vmatprep.mubr.bf16.mxu0 0
        %1184 = vmatmul.mubr.bf16.gmra.mrb[0].mxu0 %v1009
        %v1185 = vpop.f32.mrb[0].mxu0
        %v1186 = vadd.f32 %v1044, %v1185
        %v1187 = vpop.f32.mrb[0].mxu0
        %v1188 = vadd.f32 %v1048, %v1187
        %v1189 = vpop.f32.mrb[0].mxu0
        %v1190 = vadd.f32 %v1044, %v1189
        %v1191 = vpop.f32.mrb[0].mxu0
        %v1192 = vadd.f32 %v1048, %v1191
        %1193 = vmatprep.mubr.bf16.mxu0 0
        %1194 = vmatmul.mubr.bf16.gmra.mrb[0].mxu0 %v1010
        %v1195 = vpop.f32.mrb[0].mxu0
        %v1196 = vadd.f32 %v1044, %v1195
        %v1197 = vpop.f32.mrb[0].mxu0
        %v1198 = vadd.f32 %v1048, %v1197
        %v1199 = vpop.f32.mrb[0].mxu0
        %v1200 = vadd.f32 %v1044, %v1199
        %v1201 = vpop.f32.mrb[0].mxu0
        %v1202 = vadd.f32 %v1048, %v1201
        %1203 = vmatprep.mubr.bf16.mxu0 0
        %1204 = vmatmul.mubr.bf16.gmra.mrb[0].mxu0 %v1011
        %v1205 = vpop.f32.mrb[0].mxu0
        %v1206 = vadd.f32 %v1044, %v1205
        %v1207 = vpop.f32.mrb[0].mxu0
        %v1208 = vadd.f32 %v1048, %v1207
        %v1209 = vpop.f32.mrb[0].mxu0
        %v1210 = vadd.f32 %v1044, %v1209
        %v1211 = vpop.f32.mrb[0].mxu0
        %v1212 = vadd.f32 %v1048, %v1211
        %1213 = vmatprep.mubr.bf16.mxu0 0
        %1214 = vmatmul.mubr.bf16.gmra.mrb[0].mxu0 %v1012
        %v1215 = vpop.f32.mrb[0].mxu0
        %v1216 = vadd.f32 %v1044, %v1215
        %v1217 = vpop.f32.mrb[0].mxu0
        %v1218 = vadd.f32 %v1048, %v1217
        %v1219 = vpop.f32.mrb[0].mxu0
        %v1220 = vadd.f32 %v1044, %v1219
        %v1221 = vpop.f32.mrb[0].mxu0
        %v1222 = vadd.f32 %v1048, %v1221
        %1223 = vmatprep.mubr.bf16.mxu0 0
        %1224 = vmatmul.mubr.bf16.gmra.mrb[0].mxu0 %v1013
        %v1225 = vpop.f32.mrb[0].mxu0
        %v1226 = vadd.f32 %v1044, %v1225
        %v1227 = vpop.f32.mrb[0].mxu0
        %v1228 = vadd.f32 %v1048, %v1227
        %v1229 = vpop.f32.mrb[0].mxu0
        %v1230 = vadd.f32 %v1044, %v1229
        %v1231 = vpop.f32.mrb[0].mxu0
        %v1232 = vadd.f32 %v1048, %v1231
        %1233 = vmatprep.mubr.bf16.mxu0 0
        %1234 = vmatmul.mubr.bf16.gmra.mrb[0].mxu0 %v1014
        %v1235 = vpop.f32.mrb[0].mxu0
        %v1236 = vadd.f32 %v1044, %v1235
        %v1237 = vpop.f32.mrb[0].mxu0
        %v1238 = vadd.f32 %v1048, %v1237
        %v1239 = vpop.f32.mrb[0].mxu0
        %v1240 = vadd.f32 %v1044, %v1239
        %v1241 = vpop.f32.mrb[0].mxu0
        %v1242 = vadd.f32 %v1048, %v1241
        %1243 = vmatprep.mubr.bf16.mxu0 0
        %1244 = vmatmul.mubr.bf16.gmra.mrb[0].mxu0 %v1015
        %v1245 = vpop.f32.mrb[0].mxu0
        %v1246 = vadd.f32 %v1044, %v1245
        %v1247 = vpop.f32.mrb[0].mxu0
        %v1248 = vadd.f32 %v1048, %v1247
        %v1249 = vpop.f32.mrb[0].mxu0
        %v1250 = vadd.f32 %v1044, %v1249
        %v1251 = vpop.f32.mrb[0].mxu0
        %v1252 = vadd.f32 %v1048, %v1251
        %1253 = vmatprep.mubr.bf16.mxu0 0
        %1254 = vmatmul.mubr.bf16.gmra.mrb[0].mxu0 %v1016
        %v1255 = vpop.f32.mrb[0].mxu0
        %v1256 = vadd.f32 %v1044, %v1255
        %v1257 = vpop.f32.mrb[0].mxu0
        %v1258 = vadd.f32 %v1048, %v1257
        %v1259 = vpop.f32.mrb[0].mxu0
        %v1260 = vadd.f32 %v1044, %v1259
        %v1261 = vpop.f32.mrb[0].mxu0
        %v1262 = vadd.f32 %v1048, %v1261
        %1263 = vmatprep.mubr.bf16.mxu0 0
        %1264 = vmatmul.mubr.bf16.gmra.mrb[0].mxu0 %v1017
        %v1265 = vpop.f32.mrb[0].mxu0
        %v1266 = vadd.f32 %v1044, %v1265
        %v1267 = vpop.f32.mrb[0].mxu0
        %v1268 = vadd.f32 %v1048, %v1267
        %v1269 = vpop.f32.mrb[0].mxu0
        %v1270 = vadd.f32 %v1044, %v1269
        %v1271 = vpop.f32.mrb[0].mxu0
        %v1272 = vadd.f32 %v1048, %v1271
        %1273 = vmatprep.mubr.bf16.mxu0 0
        %1274 = vmatmul.mubr.bf16.gmra.mrb[0].mxu0 %v1018
        %v1275 = vpop.f32.mrb[0].mxu0
        %v1276 = vadd.f32 %v1044, %v1275
        %v1277 = vpop.f32.mrb[0].mxu0
        %v1278 = vadd.f32 %v1048, %v1277
        %v1279 = vpop.f32.mrb[0].mxu0
        %v1280 = vadd.f32 %v1044, %v1279
        %v1281 = vpop.f32.mrb[0].mxu0
        %v1282 = vadd.f32 %v1048, %v1281
        %1283 = vmatprep.mubr.bf16.mxu0 0
        %1284 = vmatmul.mubr.bf16.gmra.mrb[0].mxu0 %v1019
        %v1285 = vpop.f32.mrb[0].mxu0
        %v1286 = vadd.f32 %v1044, %v1285
        %v1287 = vpop.f32.mrb[0].mxu0
        %v1288 = vadd.f32 %v1048, %v1287
        %v1289 = vpop.f32.mrb[0].mxu0
        %v1290 = vadd.f32 %v1044, %v1289
        %v1291 = vpop.f32.mrb[0].mxu0
        %v1292 = vadd.f32 %v1048, %v1291
        %1293 = vmatprep.mubr.bf16.mxu0 0
        %1294 = vmatmul.mubr.bf16.gmra.mrb[0].mxu0 %v1020
        %v1295 = vpop.f32.mrb[0].mxu0
        %v1296 = vadd.f32 %v1044, %v1295
        %v1297 = vpop.f32.mrb[0].mxu0
        %v1298 = vadd.f32 %v1048, %v1297
        %v1299 = vpop.f32.mrb[0].mxu0
        %v1300 = vadd.f32 %v1044, %v1299
        %v1301 = vpop.f32.mrb[0].mxu0
        %v1302 = vadd.f32 %v1048, %v1301
        %1303 = vmatprep.mubr.bf16.mxu0 0
        %1304 = vmatmul.mubr.bf16.gmra.mrb[0].mxu0 %v1021
        %v1305 = vpop.f32.mrb[0].mxu0
        %v1306 = vadd.f32 %v1044, %v1305
        %v1307 = vpop.f32.mrb[0].mxu0
        %v1308 = vadd.f32 %v1048, %v1307
        %v1309 = vpop.f32.mrb[0].mxu0
        %v1310 = vadd.f32 %v1044, %v1309
        %v1311 = vpop.f32.mrb[0].mxu0
        %v1312 = vadd.f32 %v1048, %v1311
        %1313 = vmatprep.mubr.bf16.mxu0 0
        %1314 = vmatmul.mubr.bf16.gmra.mrb[0].mxu0 %v1022
        %v1315 = vpop.f32.mrb[0].mxu0
        %v1316 = vadd.f32 %v1044, %v1315
        %v1317 = vpop.f32.mrb[0].mxu0
        %v1318 = vadd.f32 %v1048, %v1317
        %v1319 = vpop.f32.mrb[0].mxu0
        %v1320 = vadd.f32 %v1044, %v1319
        %v1321 = vpop.f32.mrb[0].mxu0
        %v1322 = vadd.f32 %v1048, %v1321
        %1323 = vdwg.mxu0
        %v1324 = vpack.c.bf16 %v1170, %v1166
        %v1325 = vpack.c.bf16 %v1180, %v1176
        %v1326 = vpack.c.bf16 %v1190, %v1186
        %v1327 = vpack.c.bf16 %v1200, %v1196
        %v1328 = vpack.c.bf16 %v1210, %v1206
        %v1329 = vpack.c.bf16 %v1220, %v1216
        %v1330 = vpack.c.bf16 %v1230, %v1226
        %v1331 = vpack.c.bf16 %v1240, %v1236
        %v1332 = vpack.c.bf16 %v1250, %v1246
        %v1333 = vpack.c.bf16 %v1260, %v1256
        %v1334 = vpack.c.bf16 %v1270, %v1266
        %v1335 = vpack.c.bf16 %v1280, %v1276
        %v1336 = vpack.c.bf16 %v1290, %v1286
        %v1337 = vpack.c.bf16 %v1300, %v1296
        %v1338 = vpack.c.bf16 %v1310, %v1306
        %v1339 = vpack.c.bf16 %v1320, %v1316
        %v1356 = vunpack.c.l.b16 %v1324
        %v1357 = vunpack.c.h.b16 %v1324
        %v1358 = vunpack.c.l.b16 %v1325
        %v1359 = vunpack.c.h.b16 %v1325
        %v1360 = vunpack.c.l.b16 %v1326
        %v1361 = vunpack.c.h.b16 %v1326
        %v1362 = vunpack.c.l.b16 %v1327
        %v1363 = vunpack.c.h.b16 %v1327
        %v1364 = vunpack.c.l.b16 %v1328
        %v1365 = vunpack.c.h.b16 %v1328
        %v1366 = vunpack.c.l.b16 %v1329
        %v1367 = vunpack.c.h.b16 %v1329
        %v1368 = vunpack.c.l.b16 %v1330
        %v1369 = vunpack.c.h.b16 %v1330
        %v1370 = vunpack.c.l.b16 %v1331
        %v1371 = vunpack.c.h.b16 %v1331
        %v1372 = vunpack.c.l.b16 %v1332
        %v1373 = vunpack.c.h.b16 %v1332
        %v1374 = vunpack.c.l.b16 %v1333
        %v1375 = vunpack.c.h.b16 %v1333
        %v1376 = vunpack.c.l.b16 %v1334
        %v1377 = vunpack.c.h.b16 %v1334
        %v1378 = vunpack.c.l.b16 %v1335
        %v1379 = vunpack.c.h.b16 %v1335
        %v1380 = vunpack.c.l.b16 %v1336
        %v1381 = vunpack.c.h.b16 %v1336
        %v1382 = vunpack.c.l.b16 %v1337
        %v1383 = vunpack.c.h.b16 %v1337
        %v1384 = vunpack.c.l.b16 %v1338
        %v1385 = vunpack.c.h.b16 %v1338
        %v1386 = vunpack.c.l.b16 %v1339
        %v1387 = vunpack.c.h.b16 %v1339
        %v1388 = vpack.c.b16 %v1356, %v1356
        %v1389 = vpack.c.b16 %v1357, %v1357
        %v1390 = vpack.c.b16 %v1358, %v1358
        %v1391 = vpack.c.b16 %v1359, %v1359
        %v1392 = vpack.c.b16 %v1360, %v1360
        %v1393 = vpack.c.b16 %v1361, %v1361
        %v1394 = vpack.c.b16 %v1362, %v1362
        %v1395 = vpack.c.b16 %v1363, %v1363
        %v1396 = vpack.c.b16 %v1364, %v1364
        %v1397 = vpack.c.b16 %v1365, %v1365
        %v1398 = vpack.c.b16 %v1366, %v1366
        %v1399 = vpack.c.b16 %v1367, %v1367
        %v1400 = vpack.c.b16 %v1368, %v1368
        %v1401 = vpack.c.b16 %v1369, %v1369
        %v1402 = vpack.c.b16 %v1370, %v1370
        %v1403 = vpack.c.b16 %v1371, %v1371
        %v1404 = vpack.c.b16 %v1372, %v1372
        %v1405 = vpack.c.b16 %v1373, %v1373
        %v1406 = vpack.c.b16 %v1374, %v1374
        %v1407 = vpack.c.b16 %v1375, %v1375
        %v1408 = vpack.c.b16 %v1376, %v1376
        %v1409 = vpack.c.b16 %v1377, %v1377
        %v1410 = vpack.c.b16 %v1378, %v1378
        %v1411 = vpack.c.b16 %v1379, %v1379
        %v1412 = vpack.c.b16 %v1380, %v1380
        %v1413 = vpack.c.b16 %v1381, %v1381
        %v1414 = vpack.c.b16 %v1382, %v1382
        %v1415 = vpack.c.b16 %v1383, %v1383
        %v1416 = vpack.c.b16 %v1384, %v1384
        %v1417 = vpack.c.b16 %v1385, %v1385
        %v1418 = vpack.c.b16 %v1386, %v1386
        %v1419 = vpack.c.b16 %v1387, %v1387
        %1452 = vst [vmem:[%s308] sm:$0xf] %v1388
        %1453 = vst [vmem:[%s308 + $0x4] sm:$0xf] %v1389
        %1454 = vst [vmem:[%s308 + $0x8] sm:$0xf] %v1390
        %1455 = vst [vmem:[%s308 + $0xc] sm:$0xf] %v1391
        %1456 = vst [vmem:[%s308 + $0x10] sm:$0xf] %v1392
        %1457 = vst [vmem:[%s308 + $0x14] sm:$0xf] %v1393
        %1458 = vst [vmem:[%s308 + $0x18] sm:$0xf] %v1394
        %1459 = vst [vmem:[%s308 + $0x1c] sm:$0xf] %v1395
        %1460 = vst [vmem:[%s308 + $0x20] sm:$0xf] %v1396
        %1461 = vst [vmem:[%s308 + $0x24] sm:$0xf] %v1397
        %1462 = vst [vmem:[%s308 + $0x28] sm:$0xf] %v1398
        %1463 = vst [vmem:[%s308 + $0x2c] sm:$0xf] %v1399
        %1464 = vst [vmem:[%s308 + $0x30] sm:$0xf] %v1400
        %1465 = vst [vmem:[%s308 + $0x34] sm:$0xf] %v1401
        %1466 = vst [vmem:[%s308 + $0x38] sm:$0xf] %v1402
        %1467 = vst [vmem:[%s308 + $0x3c] sm:$0xf] %v1403
        %1468 = vst [vmem:[%s308 + $0x40] sm:$0xf] %v1404
        %1469 = vst [vmem:[%s308 + $0x44] sm:$0xf] %v1405
        %1470 = vst [vmem:[%s308 + $0x48] sm:$0xf] %v1406
        %1471 = vst [vmem:[%s308 + $0x4c] sm:$0xf] %v1407
        %1472 = vst [vmem:[%s308 + $0x50] sm:$0xf] %v1408
        %1473 = vst [vmem:[%s308 + $0x54] sm:$0xf] %v1409
        %1474 = vst [vmem:[%s308 + $0x58] sm:$0xf] %v1410
        %1475 = vst [vmem:[%s308 + $0x5c] sm:$0xf] %v1411
        %1476 = vst [vmem:[%s308 + $0x60] sm:$0xf] %v1412
        %1477 = vst [vmem:[%s308 + $0x64] sm:$0xf] %v1413
        %1478 = vst [vmem:[%s308 + $0x68] sm:$0xf] %v1414
        %1479 = vst [vmem:[%s308 + $0x6c] sm:$0xf] %v1415
        %1480 = vst [vmem:[%s308 + $0x70] sm:$0xf] %v1416
        %1481 = vst [vmem:[%s308 + $0x74] sm:$0xf] %v1417
        %1482 = vst [vmem:[%s308 + $0x78] sm:$0xf] %v1418
        %1483 = vst [vmem:[%s308 + $0x7c] sm:$0xf] %v1419
        %v1484 = vpack.c.bf16 %v1172, %v1168
        %v1485 = vpack.c.bf16 %v1182, %v1178
        %v1486 = vpack.c.bf16 %v1192, %v1188
        %v1487 = vpack.c.bf16 %v1202, %v1198
        %v1488 = vpack.c.bf16 %v1212, %v1208
        %v1489 = vpack.c.bf16 %v1222, %v1218
        %v1490 = vpack.c.bf16 %v1232, %v1228
        %v1491 = vpack.c.bf16 %v1242, %v1238
        %v1492 = vpack.c.bf16 %v1252, %v1248
        %v1493 = vpack.c.bf16 %v1262, %v1258
        %v1494 = vpack.c.bf16 %v1272, %v1268
        %v1495 = vpack.c.bf16 %v1282, %v1278
        %v1496 = vpack.c.bf16 %v1292, %v1288
        %v1497 = vpack.c.bf16 %v1302, %v1298
        %v1498 = vpack.c.bf16 %v1312, %v1308
        %v1499 = vpack.c.bf16 %v1322, %v1318
        %v1516 = vunpack.c.l.b16 %v1484
        %v1517 = vunpack.c.h.b16 %v1484
        %v1518 = vunpack.c.l.b16 %v1485
        %v1519 = vunpack.c.h.b16 %v1485
        %v1520 = vunpack.c.l.b16 %v1486
        %v1521 = vunpack.c.h.b16 %v1486
        %v1522 = vunpack.c.l.b16 %v1487
        %v1523 = vunpack.c.h.b16 %v1487
        %v1524 = vunpack.c.l.b16 %v1488
        %v1525 = vunpack.c.h.b16 %v1488
        %v1526 = vunpack.c.l.b16 %v1489
        %v1527 = vunpack.c.h.b16 %v1489
        %v1528 = vunpack.c.l.b16 %v1490
        %v1529 = vunpack.c.h.b16 %v1490
        %v1530 = vunpack.c.l.b16 %v1491
        %v1531 = vunpack.c.h.b16 %v1491
        %v1532 = vunpack.c.l.b16 %v1492
        %v1533 = vunpack.c.h.b16 %v1492
        %v1534 = vunpack.c.l.b16 %v1493
        %v1535 = vunpack.c.h.b16 %v1493
        %v1536 = vunpack.c.l.b16 %v1494
        %v1537 = vunpack.c.h.b16 %v1494
        %v1538 = vunpack.c.l.b16 %v1495
        %v1539 = vunpack.c.h.b16 %v1495
        %v1540 = vunpack.c.l.b16 %v1496
        %v1541 = vunpack.c.h.b16 %v1496
        %v1542 = vunpack.c.l.b16 %v1497
        %v1543 = vunpack.c.h.b16 %v1497
        %v1544 = vunpack.c.l.b16 %v1498
        %v1545 = vunpack.c.h.b16 %v1498
        %v1546 = vunpack.c.l.b16 %v1499
        %v1547 = vunpack.c.h.b16 %v1499
        %v1548 = vpack.c.b16 %v1516, %v1516
        %v1549 = vpack.c.b16 %v1517, %v1517
        %v1550 = vpack.c.b16 %v1518, %v1518
        %v1551 = vpack.c.b16 %v1519, %v1519
        %v1552 = vpack.c.b16 %v1520, %v1520
        %v1553 = vpack.c.b16 %v1521, %v1521
        %v1554 = vpack.c.b16 %v1522, %v1522
        %v1555 = vpack.c.b16 %v1523, %v1523
        %v1556 = vpack.c.b16 %v1524, %v1524
        %v1557 = vpack.c.b16 %v1525, %v1525
        %v1558 = vpack.c.b16 %v1526, %v1526
        %v1559 = vpack.c.b16 %v1527, %v1527
        %v1560 = vpack.c.b16 %v1528, %v1528
        %v1561 = vpack.c.b16 %v1529, %v1529
        %v1562 = vpack.c.b16 %v1530, %v1530
        %v1563 = vpack.c.b16 %v1531, %v1531
        %v1564 = vpack.c.b16 %v1532, %v1532
        %v1565 = vpack.c.b16 %v1533, %v1533
        %v1566 = vpack.c.b16 %v1534, %v1534
        %v1567 = vpack.c.b16 %v1535, %v1535
        %v1568 = vpack.c.b16 %v1536, %v1536
        %v1569 = vpack.c.b16 %v1537, %v1537
        %v1570 = vpack.c.b16 %v1538, %v1538
        %v1571 = vpack.c.b16 %v1539, %v1539
        %v1572 = vpack.c.b16 %v1540, %v1540
        %v1573 = vpack.c.b16 %v1541, %v1541
        %v1574 = vpack.c.b16 %v1542, %v1542
        %v1575 = vpack.c.b16 %v1543, %v1543
        %v1576 = vpack.c.b16 %v1544, %v1544
        %v1577 = vpack.c.b16 %v1545, %v1545
        %v1578 = vpack.c.b16 %v1546, %v1546
        %v1579 = vpack.c.b16 %v1547, %v1547
        %1612 = vst [vmem:[%s315] sm:$0xf] %v1548
        %1613 = vst [vmem:[%s315 + $0x4] sm:$0xf] %v1549
        %1614 = vst [vmem:[%s315 + $0x8] sm:$0xf] %v1550
        %1615 = vst [vmem:[%s315 + $0xc] sm:$0xf] %v1551
        %1616 = vst [vmem:[%s315 + $0x10] sm:$0xf] %v1552
        %1617 = vst [vmem:[%s315 + $0x14] sm:$0xf] %v1553
        %1618 = vst [vmem:[%s315 + $0x18] sm:$0xf] %v1554
        %1619 = vst [vmem:[%s315 + $0x1c] sm:$0xf] %v1555
        %1620 = vst [vmem:[%s315 + $0x20] sm:$0xf] %v1556
        %1621 = vst [vmem:[%s315 + $0x24] sm:$0xf] %v1557
        %1622 = vst [vmem:[%s315 + $0x28] sm:$0xf] %v1558
        %1623 = vst [vmem:[%s315 + $0x2c] sm:$0xf] %v1559
        %1624 = vst [vmem:[%s315 + $0x30] sm:$0xf] %v1560
        %1625 = vst [vmem:[%s315 + $0x34] sm:$0xf] %v1561
        %1626 = vst [vmem:[%s315 + $0x38] sm:$0xf] %v1562
        %1627 = vst [vmem:[%s315 + $0x3c] sm:$0xf] %v1563
        %1628 = vst [vmem:[%s315 + $0x40] sm:$0xf] %v1564
        %1629 = vst [vmem:[%s315 + $0x44] sm:$0xf] %v1565
        %1630 = vst [vmem:[%s315 + $0x48] sm:$0xf] %v1566
        %1631 = vst [vmem:[%s315 + $0x4c] sm:$0xf] %v1567
        %1632 = vst [vmem:[%s315 + $0x50] sm:$0xf] %v1568
        %1633 = vst [vmem:[%s315 + $0x54] sm:$0xf] %v1569
        %1634 = vst [vmem:[%s315 + $0x58] sm:$0xf] %v1570
        %1635 = vst [vmem:[%s315 + $0x5c] sm:$0xf] %v1571
        %1636 = vst [vmem:[%s315 + $0x60] sm:$0xf] %v1572
        %1637 = vst [vmem:[%s315 + $0x64] sm:$0xf] %v1573
        %1638 = vst [vmem:[%s315 + $0x68] sm:$0xf] %v1574
        %1639 = vst [vmem:[%s315 + $0x6c] sm:$0xf] %v1575
        %1640 = vst [vmem:[%s315 + $0x70] sm:$0xf] %v1576
        %1641 = vst [vmem:[%s315 + $0x74] sm:$0xf] %v1577
        %1642 = vst [vmem:[%s315 + $0x78] sm:$0xf] %v1578
        %1643 = vst [vmem:[%s315 + $0x7c] sm:$0xf] %v1579
        %s1644 = sand.u32 %s162, 1
        %s1645 = scalar_lea.sflag [#allocation4], %s1644
        %s1646 = sand.u32 %s162, 1
        %s1647 = smul.addr %s1646, 128
        %s1648 = scalar_lea.vmem [#allocation7], %s1647
        %s1649 = sand.u32 %s190, 1
        %s1650 = scalar_lea.sflag [#allocation9], %s1649
        %s1651 = sand.u32 %s190, 1
        %s1652 = smul.addr %s1651, 128
        %s1653 = scalar_lea.vmem [#allocation8], %s1652
        // Predicated region
        $region49: #{tpu_custom_call.1} parent=39 // pred_check
          %p1654 = pneg %p172
        $region50: #{tpu_custom_call.1} parent=39 // pred_check_branch
          %1656 = sbr.rel (%p1654) target = $region52
        $region51: #{tpu_custom_call.1} parent=39 // pred_region
          %s1657 = smul.u32 32, %s33
          %s1659 = ssub.s32 2048, 2048
          %1660 = vsyncadd %s1645, %s1659
          %s1661 = smul.addr %s32, 32
          %s1662 = sadd.s32 %s1657, %s1661
          %s1663 = smul.addr %s1662, 64
          %s1664 = scalar_lea.hbm %s5, %s1663
          %s1665 = sshll.u32 %s1648, 4
          %s1666 = int_to_ptr.vmem [resolvable:$true] %s1665
          %1671 = dma.vmem_to_hbm [thread:$0]  %s1666, 2048, %s1664, %s1645, 64, 64, 4
        $region52: #{tpu_custom_call.1} parent=39 // pred_fallthru
          _
        // Predicated region
        $region53: #{tpu_custom_call.1} parent=39 // pred_check
          %p1672 = pneg %p200
        $region54: #{tpu_custom_call.1} parent=39 // pred_check_branch
          %1674 = sbr.rel (%p1672) target = $region56
        $region55: #{tpu_custom_call.1} parent=39 // pred_region
          %s1675 = smul.u32 32, %s33
          %s1677 = ssub.s32 2048, 2048
          %1678 = vsyncadd %s1650, %s1677
          %s1679 = smul.addr %s32, 32
          %s1680 = sadd.s32 %s1675, %s1679
          %s1681 = smul.addr %s1680, 64
          %s1682 = scalar_lea.hbm %s6, %s1681
          %s1683 = sshll.u32 %s1653, 4
          %s1684 = int_to_ptr.vmem [resolvable:$true] %s1683
          %1689 = dma.vmem_to_hbm [thread:$0]  %s1684, 2048, %s1682, %s1650, 64, 64, 4
        $region56: #{tpu_custom_call.1} parent=39 // pred_fallthru
          _
      $region40: #{tpu_custom_call.1} parent=5 // pred_fallthru
        _
      %p1690 = scmp.le.s32.totalorder 2, %s23
      // Predicated region
      $region57: #{tpu_custom_call.1} parent=5 // pred_check
        %p1691 = pneg %p1690
      $region58: #{tpu_custom_call.1} parent=5 // pred_check_branch
        %1693 = sbr.rel (%p1691) target = $region60
      $region59: #{tpu_custom_call.1} parent=5 // pred_region
        %s1694 = ssub.s32 %s23, 2
        // Predicated region
        $region61: #{tpu_custom_call.1} parent=59 // pred_check
          %p1695 = pneg %p178
        $region62: #{tpu_custom_call.1} parent=59 // pred_check_branch
          %1697 = sbr.rel (%p1695) target = $region64
        $region63: #{tpu_custom_call.1} parent=59 // pred_region
          %s1698 = sand.u32 %s163, 1
          %s1699 = scalar_lea.sflag [#allocation4], %s1698
          %s1700 = sand.u32 %s163, 1
          %s1701 = smul.addr %s1700, 128
          %s1702 = scalar_lea.vmem [#allocation7], %s1701
          %1703 = dma.done %s1699, 2048
        $region64: #{tpu_custom_call.1} parent=59 // pred_fallthru
          _
        // Predicated region
        $region65: #{tpu_custom_call.1} parent=59 // pred_check
          %p1704 = pneg %p206
        $region66: #{tpu_custom_call.1} parent=59 // pred_check_branch
          %1706 = sbr.rel (%p1704) target = $region68
        $region67: #{tpu_custom_call.1} parent=59 // pred_region
          %s1707 = sand.u32 %s191, 1
          %s1708 = scalar_lea.sflag [#allocation9], %s1707
          %s1709 = sand.u32 %s191, 1
          %s1710 = smul.addr %s1709, 128
          %s1711 = scalar_lea.vmem [#allocation8], %s1710
          %1712 = dma.done %s1708, 2048
        $region68: #{tpu_custom_call.1} parent=59 // pred_fallthru
          _
      $region60: #{tpu_custom_call.1} parent=5 // pred_fallthru
        _
    $region6: #{tpu_custom_call.1} parent=1 // loop_footer
      %s27 = sadd.s32 1, %s23
    $region7: #{tpu_custom_call.1} parent=1 // loop_footer_branch
      %22 = sbr.rel target = $region3
    $region8: #{tpu_custom_call.1} parent=1 // loop_exit
      _
    %1713 = vsyncpa [#allocation3], 1
    %s1714 = scalar_lea.sflag [#allocation3], 1
    %1715 = vsyncpa %s1714, 1
    %1716 = vsyncpa [#allocation6], 1
    %1717 = vsyncpa [#allocation4], 1
    %s1718 = scalar_lea.sflag [#allocation4], 1
    %1719 = vsyncpa %s1718, 1
    %1720 = vsyncpa [#allocation9], 1
    %s1721 = scalar_lea.sflag [#allocation9], 1
    %1722 = vsyncpa %s1721, 1

</llo_original>
